<compile_context>
chip_gen: v5e
topology: v5e:2x2
jax: 0.10.0
libtpu: 0.0.40
codegen_flags: <defaults>
</compile_context>

<pallas_src>
import jax
import jax.numpy as jnp
from jax.experimental import pallas as pl
from jax.experimental.pallas import tpu as pltpu


# ---------------------------------------------------------------------------
# Fused Pallas kernel
# ---------------------------------------------------------------------------

def _flkpe_fused_kernel(x_ref, w1_ref, s1_ref, dww_ref, dwb_ref,
                        w2_ref, gm_ref, bc_ref, o_ref, e_ref):
    # x_ref : (1, H, W, dim)     full NHWC input image for this batch (small)
    # w1_ref: (dim, C16)         1x1 conv weight with BN scale folded in
    # s1_ref: (1, C16)           folded conv bias + BN shift
    # dww_ref: (9, C16)          depthwise 3x3 taps (row-major i*3+j)
    # dwb_ref: (1, C16)          depthwise bias
    # w2_ref: (C16, G*NC)        block-diag (LN gamma * wout), mean-centered
    # gm_ref: (C16, G*NC)        block-diag group-mean matrix (1/dim entries)
    # bc_ref: (1, G*NC)          folded LN beta @ wout + output-conv bias
    # o_ref : (1, TH, W, G*NC)   grouped-channel output row tile
    # e_ref : (TH+2, W+2, C16)   scratch: expanded + zero-padded slab
    _, _, W, dim = x_ref.shape
    _, TH, _, GNC = o_ref.shape
    C16 = e_ref.shape[2]

    t = pl.program_id(1)
    nt = pl.num_programs(1)
    h0 = pl.multiple_of(t * TH, TH)

    s1 = s1_ref[0, :]

    def expand_rows(row_start, nrows):
        # 1x1 conv (dim -> C16) + folded BN + ReLU on `nrows` image rows.
        # dim is tiny, so run it as unrolled VPU broadcast-FMA (MXU-free).
        xs = x_ref[0, pl.ds(row_start, nrows), :, :]          # (nrows, W, dim)
        acc = xs[:, :, 0:1] * w1_ref[0, :]
        for c in range(1, dim):
            acc = acc + xs[:, :, c:c + 1] * w1_ref[c, :]
        return jnp.maximum(acc + s1, 0.0)                     # (nrows, W, C16)

    zrow = jnp.zeros((1, W, C16), jnp.float32)

    # Zero side columns (the 3x3 padding acts on the *expanded* tensor).
    e_ref[:, 0:1, :] = jnp.zeros((TH + 2, 1, C16), jnp.float32)
    e_ref[:, W + 1:W + 2, :] = jnp.zeros((TH + 2, 1, C16), jnp.float32)

    # Interior rows of the slab (the TH rows this tile produces).
    e_ref[1:TH + 1, 1:W + 1, :] = expand_rows(h0, TH)

    # Top / bottom halo rows: recomputed from x, zero at the image border.
    @pl.when(t == 0)
    def _():
        e_ref[0:1, 1:W + 1, :] = zrow

    @pl.when(t > 0)
    def _():
        e_ref[0:1, 1:W + 1, :] = expand_rows(h0 - 1, 1)

    @pl.when(t == nt - 1)
    def _():
        e_ref[TH + 1:TH + 2, 1:W + 1, :] = zrow

    @pl.when(t < nt - 1)
    def _():
        e_ref[TH + 1:TH + 2, 1:W + 1, :] = expand_rows(h0 + TH, 1)

    # Depthwise 3x3: build the three W-shifted slabs once (2 unaligned reads),
    # reuse them across the three H taps (leading-axis slices are free).
    dww = dww_ref[...]                                        # (9, C16)
    eL = e_ref[:, 0:W, :]                                     # (TH+2, W, C16)
    eC = e_ref[:, 1:W + 1, :]
    eR = e_ref[:, 2:W + 2, :]
    acc = eL[0:TH] * dww[0] + eC[0:TH] * dww[1] + eR[0:TH] * dww[2]
    acc = acc + eL[1:TH + 1] * dww[3] + eC[1:TH + 1] * dww[4] + eR[1:TH + 1] * dww[5]
    acc = acc + eL[2:TH + 2] * dww[6] + eC[2:TH + 2] * dww[7] + eR[2:TH + 2] * dww[8]
    dw = acc + dwb_ref[0, :]                                  # (TH, W, C16)

    # Per-group (pixel-shuffle group of `dim` channels) LayerNorm + output
    # 1x1 conv, folded into block-diagonal matmuls so lane widths stay dense.
    dwf = dw.reshape(TH * W, C16)
    cen = jnp.dot(dwf, w2_ref[...], preferred_element_type=jnp.float32)
    mu = jnp.dot(dwf, gm_ref[...], preferred_element_type=jnp.float32)
    sq = jnp.dot(dwf * dwf, gm_ref[...], preferred_element_type=jnp.float32)
    var = jnp.maximum(sq - mu * mu, 0.0)
    out = cen * jax.lax.rsqrt(var + 1e-5) + bc_ref[0, :]      # (TH*W, G*NC)
    o_ref[0, :, :, :] = out.reshape(TH, W, GNC)


# ---------------------------------------------------------------------------
# Wrapper (FLKPE forward)
# ---------------------------------------------------------------------------

def _pick_tile_h(H, W, C16):
    """Largest divisor of H whose working set fits a modest VMEM budget,
    preferring >= 2 row tiles for pipelining / megacore sharding."""
    budget = 8 << 20
    divisors = [d for d in range(1, H + 1) if H % d == 0]
    ok = [d for d in divisors if (d + 2) * (W + 2) * C16 * 4 * 6 <= budget]
    if not ok:
        return 1
    multi = [d for d in ok if H // d >= 2]
    return max(multi) if multi else max(ok)


def flkpe_forward(x_nchw, params, *, dim_scale=4):
    B, dim, H, W = x_nchw.shape
    C16 = params["w1"].shape[1]                  # dim * 16
    NC = params["wout"].shape[1]                 # num_classes
    G = dim_scale * dim_scale                    # 16
    GNC = G * NC
    assert C16 == G * dim

    f32 = jnp.float32

    # ---- fold BatchNorm (inference) into the 1x1 conv -----------------------
    w1f = (params["w1"] * params["bn_scale"][None, :]).astype(f32)
    s1 = (params["b1"] * params["bn_scale"] + params["bn_shift"]).astype(f32)

    # ---- fold LayerNorm(dim) + output 1x1 conv into block-diag matrices -----
    ln_g = params["ln_g"].astype(f32)
    ln_b = params["ln_b"].astype(f32)
    wout = params["wout"].astype(f32)
    bout = params["bout"].astype(f32)
    a_vec = jnp.einsum("c,cn->n", ln_g, wout)                     # (NC,)
    blk = ln_g[:, None] * wout - a_vec[None, :] / dim             # (dim, NC)
    eye_g = jnp.eye(G, dtype=f32)
    w2 = jnp.einsum("gh,cn->gchn", eye_g, blk).reshape(C16, GNC)
    gmean = jnp.einsum("gh,cn->gchn", eye_g,
                       jnp.full((dim, NC), 1.0 / dim, f32)).reshape(C16, GNC)
    bc = jnp.tile(jnp.einsum("c,cn->n", ln_b, wout) + bout, G)    # (GNC,)

    x = jnp.transpose(x_nchw, (0, 2, 3, 1)).astype(f32)           # NHWC (small)

    TH = _pick_tile_h(H, W, C16)
    grid = (B, H // TH)

    out_g = pl.pallas_call(
        _flkpe_fused_kernel,
        out_shape=jax.ShapeDtypeStruct((B, H, W, GNC), f32),
        grid=grid,
        in_specs=[
            pl.BlockSpec((1, H, W, dim), lambda b, t: (b, 0, 0, 0)),
            pl.BlockSpec((dim, C16), lambda b, t: (0, 0)),
            pl.BlockSpec((1, C16), lambda b, t: (0, 0)),
            pl.BlockSpec((9, C16), lambda b, t: (0, 0)),
            pl.BlockSpec((1, C16), lambda b, t: (0, 0)),
            pl.BlockSpec((C16, GNC), lambda b, t: (0, 0)),
            pl.BlockSpec((C16, GNC), lambda b, t: (0, 0)),
            pl.BlockSpec((1, GNC), lambda b, t: (0, 0)),
        ],
        out_specs=pl.BlockSpec((1, TH, W, GNC), lambda b, t: (b, t, 0, 0)),
        scratch_shapes=[pltpu.VMEM((TH + 2, W + 2, C16), jnp.float32)],
        compiler_params=pltpu.CompilerParams(
            dimension_semantics=("parallel", "parallel")),
    )(x, w1f, s1[None, :], params["dw_w"].astype(f32),
      params["dw_b"].astype(f32)[None, :], w2, gmean, bc[None, :])

    # grouped channels (p1 p2 nc) -> NCHW pixel shuffle on the (small) output.
    p = dim_scale
    o = out_g.reshape(B, H, W, p, p, NC)
    o = jnp.transpose(o, (0, 5, 1, 3, 2, 4))
    return o.reshape(B, NC, H * p, W * p)


# ---------------------------------------------------------------------------
# Pure-JAX reference (same math as the PyTorch module) for verification
# ---------------------------------------------------------------------------

def flkpe_reference(x_nchw, params, *, dim_scale=4):
    B, Cin, H, W = x_nchw.shape
    dim = Cin
    x = jnp.transpose(x_nchw, (0, 2, 3, 1)).astype(jnp.float32)
    t = jnp.einsum("bhwc,cd->bhwd", x, params["w1"]) + params["b1"]
    t = t * params["bn_scale"] + params["bn_shift"]
    t = jnp.maximum(t, 0.0)
    tp = jnp.pad(t, ((0, 0), (1, 1), (1, 1), (0, 0)))
    acc = jnp.zeros_like(t)
    for i in range(3):
        for j in range(3):
            acc = acc + tp[:, i:i + H, j:j + W, :] * params["dw_w"][3 * i + j]
    acc = acc + params["dw_b"]
    p = dim_scale
    z = acc.reshape(B, H, W, p, p, dim)
    z = jnp.transpose(z, (0, 1, 3, 2, 4, 5)).reshape(B, H * p, W * p, dim)
    mean = z.mean(-1, keepdims=True)
    var = ((z - mean) ** 2).mean(-1, keepdims=True)
    zn = (z - mean) / jnp.sqrt(var + 1e-5) * params["ln_g"] + params["ln_b"]
    out = jnp.einsum("bhwc,cd->bhwd", zn, params["wout"]) + params["bout"]
    return jnp.transpose(out, (0, 3, 1, 2))


# ---------------------------------------------------------------------------
# Deterministic parameter construction + smoke test
# ---------------------------------------------------------------------------

def make_params(key, dim, num_classes):
    C16 = dim * 16
    ks = jax.random.split(key, 12)
    eps = 1e-5
    bn_gamma = 1.0 + 0.1 * jax.random.normal(ks[2], (C16,), jnp.float32)
    bn_beta = 0.1 * jax.random.normal(ks[3], (C16,), jnp.float32)
    bn_mean = 0.1 * jax.random.normal(ks[4], (C16,), jnp.float32)
    bn_var = 0.5 + jnp.abs(jax.random.normal(ks[5], (C16,), jnp.float32))
    bn_scale = bn_gamma / jnp.sqrt(bn_var + eps)
    bn_shift = bn_beta - bn_mean * bn_scale
    return {
        "w1": 0.2 * jax.random.normal(ks[0], (dim, C16), jnp.float32),
        "b1": 0.1 * jax.random.normal(ks[1], (C16,), jnp.float32),
        "bn_scale": bn_scale,
        "bn_shift": bn_shift,
        "dw_w": 0.2 * jax.random.normal(ks[6], (9, C16), jnp.float32),
        "dw_b": 0.1 * jax.random.normal(ks[7], (C16,), jnp.float32),
        "ln_g": 1.0 + 0.1 * jax.random.normal(ks[8], (dim,), jnp.float32),
        "ln_b": 0.1 * jax.random.normal(ks[9], (dim,), jnp.float32),
        "wout": 0.2 * jax.random.normal(ks[10], (dim, num_classes), jnp.float32),
        "bout": 0.1 * jax.random.normal(ks[11], (num_classes,), jnp.float32),
    }


if __name__ == "__main__":
    B, dim, H, W = 2, 4, 16, 16
    num_classes = 3
    key = jax.random.PRNGKey(0)
    kx, kp = jax.random.split(key)
    x = jax.random.normal(kx, (B, dim, H, W), jnp.float32)
    params = make_params(kp, dim, num_classes)

    out = jax.block_until_ready(flkpe_forward(x, params))
    ref = jax.block_until_ready(flkpe_reference(x, params))

    assert out.shape == (B, num_classes, H * 4, W * 4), out.shape
    assert jnp.allclose(out, ref, atol=1e-3, rtol=1e-3), \
        float(jnp.max(jnp.abs(out - ref)))
    print("KERNEL_OK")
</pallas_src>

<mosaic_0001>
module attributes {stable_mosaic.version = 11 : i64} {
  func.func @_flkpe_fused_kernel(%arg0: i32, %arg1: i32, %arg2: memref<1x16x16x4xf32, #tpu.memory_space<vmem>>, %arg3: memref<4x64xf32, #tpu.memory_space<vmem>>, %arg4: memref<1x64xf32, #tpu.memory_space<vmem>>, %arg5: memref<9x64xf32, #tpu.memory_space<vmem>>, %arg6: memref<1x64xf32, #tpu.memory_space<vmem>>, %arg7: memref<64x48xf32, #tpu.memory_space<vmem>>, %arg8: memref<64x48xf32, #tpu.memory_space<vmem>>, %arg9: memref<1x48xf32, #tpu.memory_space<vmem>>, %arg10: memref<1x8x16x48xf32, #tpu.memory_space<vmem>>, %arg11: memref<10x18x64xf32, #tpu.memory_space<vmem>>) attributes {dimension_semantics = [#tpu.dimension_semantics<parallel>, #tpu.dimension_semantics<parallel>], iteration_bounds = array<i64: 2, 2>, scalar_prefetch = 0 : i64, scratch_operands = 1 : i64, tpu.core_type = #tpu.core_type<tc>, window_params = [{transform_indices = @transform_0, window_bounds = array<i64: 1, 16, 16, 4>}, {pipeline_mode = #tpu.pipeline_mode<synchronous>, transform_indices = @transform_1, window_bounds = array<i64: 4, 64>}, {pipeline_mode = #tpu.pipeline_mode<synchronous>, transform_indices = @transform_2, window_bounds = array<i64: 1, 64>}, {pipeline_mode = #tpu.pipeline_mode<synchronous>, transform_indices = @transform_3, window_bounds = array<i64: 9, 64>}, {pipeline_mode = #tpu.pipeline_mode<synchronous>, transform_indices = @transform_4, window_bounds = array<i64: 1, 64>}, {pipeline_mode = #tpu.pipeline_mode<synchronous>, transform_indices = @transform_5, window_bounds = array<i64: 64, 48>}, {pipeline_mode = #tpu.pipeline_mode<synchronous>, transform_indices = @transform_6, window_bounds = array<i64: 64, 48>}, {pipeline_mode = #tpu.pipeline_mode<synchronous>, transform_indices = @transform_7, window_bounds = array<i64: 1, 48>}, {transform_indices = @transform_8, window_bounds = array<i64: 1, 8, 16, 48>}]} {
    %c8_i32 = arith.constant 8 : i32
    %0 = arith.muli %arg1, %c8_i32 : i32
    %1 = tpu.assume_multiple %0, 8 : i32
    %c0 = arith.constant 0 : index
    %c0_0 = arith.constant 0 : index
    %2 = vector.load %arg4[%c0, %c0_0] : memref<1x64xf32, #tpu.memory_space<vmem>>, vector<1x64xf32>
    %3 = vector.shape_cast %2 : vector<1x64xf32> to vector<64xf32>
    %cst = arith.constant 0.000000e+00 : f32
    %4 = vector.broadcast %cst : f32 to vector<1x16x64xf32>
    %cst_1 = arith.constant 0.000000e+00 : f32
    %5 = vector.broadcast %cst_1 : f32 to vector<10x1x64xf32>
    %c0_2 = arith.constant 0 : index
    %c0_3 = arith.constant 0 : index
    %c0_4 = arith.constant 0 : index
    %6 = vector.load %arg11[%c0_2, %c0_3, %c0_4] : memref<10x18x64xf32, #tpu.memory_space<vmem>>, vector<10x1x64xf32>
    tpu.vector_store %arg11[%c0_2, %c0_3, %c0_4], %5 {strides = array<i32>} : memref<10x18x64xf32, #tpu.memory_space<vmem>>, vector<10x1x64xf32>,
    %cst_5 = arith.constant 0.000000e+00 : f32
    %7 = vector.broadcast %cst_5 : f32 to vector<10x1x64xf32>
    %c0_6 = arith.constant 0 : index
    %c17 = arith.constant 17 : index
    %c0_7 = arith.constant 0 : index
    %8 = vector.load %arg11[%c0_6, %c17, %c0_7] : memref<10x18x64xf32, #tpu.memory_space<vmem>>, vector<10x1x64xf32>
    tpu.vector_store %arg11[%c0_6, %c17, %c0_7], %7 {strides = array<i32>} : memref<10x18x64xf32, #tpu.memory_space<vmem>>, vector<10x1x64xf32>,
    %c0_8 = arith.constant 0 : index
    %9 = arith.index_cast %1 : i32 to index
    %c0_9 = arith.constant 0 : index
    %c0_10 = arith.constant 0 : index
    %10 = vector.load %arg2[%c0_8, %9, %c0_9, %c0_10] : memref<1x16x16x4xf32, #tpu.memory_space<vmem>>, vector<1x8x16x4xf32>
    %11 = vector.shape_cast %10 : vector<1x8x16x4xf32> to vector<8x16x4xf32>
    %12 = vector.extract_strided_slice %11 {offsets = [0, 0, 0], sizes = [8, 16, 1], strides = [1, 1, 1]} : vector<8x16x4xf32> to vector<8x16x1xf32>
    %c0_11 = arith.constant 0 : index
    %c0_12 = arith.constant 0 : index
    %13 = vector.load %arg3[%c0_11, %c0_12] : memref<4x64xf32, #tpu.memory_space<vmem>>, vector<1x64xf32>
    %14 = vector.shape_cast %13 : vector<1x64xf32> to vector<64xf32>
    %15 = vector.shape_cast %14 : vector<64xf32> to vector<1x1x64xf32>
    %16 = vector.broadcast %12 : vector<8x16x1xf32> to vector<8x16x64xf32>
    %17 = vector.broadcast %15 : vector<1x1x64xf32> to vector<8x16x64xf32>
    %18 = arith.mulf %16, %17 : vector<8x16x64xf32>
    %19 = vector.extract_strided_slice %11 {offsets = [0, 0, 1], sizes = [8, 16, 1], strides = [1, 1, 1]} : vector<8x16x4xf32> to vector<8x16x1xf32>
    %c1 = arith.constant 1 : index
    %c0_13 = arith.constant 0 : index
    %20 = vector.load %arg3[%c1, %c0_13] : memref<4x64xf32, #tpu.memory_space<vmem>>, vector<1x64xf32>
    %21 = vector.shape_cast %20 : vector<1x64xf32> to vector<64xf32>
    %22 = vector.shape_cast %21 : vector<64xf32> to vector<1x1x64xf32>
    %23 = vector.broadcast %19 : vector<8x16x1xf32> to vector<8x16x64xf32>
    %24 = vector.broadcast %22 : vector<1x1x64xf32> to vector<8x16x64xf32>
    %25 = arith.mulf %23, %24 : vector<8x16x64xf32>
    %26 = arith.addf %18, %25 : vector<8x16x64xf32>
    %27 = vector.extract_strided_slice %11 {offsets = [0, 0, 2], sizes = [8, 16, 1], strides = [1, 1, 1]} : vector<8x16x4xf32> to vector<8x16x1xf32>
    %c2 = arith.constant 2 : index
    %c0_14 = arith.constant 0 : index
    %28 = vector.load %arg3[%c2, %c0_14] : memref<4x64xf32, #tpu.memory_space<vmem>>, vector<1x64xf32>
    %29 = vector.shape_cast %28 : vector<1x64xf32> to vector<64xf32>
    %30 = vector.shape_cast %29 : vector<64xf32> to vector<1x1x64xf32>
    %31 = vector.broadcast %27 : vector<8x16x1xf32> to vector<8x16x64xf32>
    %32 = vector.broadcast %30 : vector<1x1x64xf32> to vector<8x16x64xf32>
    %33 = arith.mulf %31, %32 : vector<8x16x64xf32>
    %34 = arith.addf %26, %33 : vector<8x16x64xf32>
    %35 = vector.extract_strided_slice %11 {offsets = [0, 0, 3], sizes = [8, 16, 1], strides = [1, 1, 1]} : vector<8x16x4xf32> to vector<8x16x1xf32>
    %c3 = arith.constant 3 : index
    %c0_15 = arith.constant 0 : index
    %36 = vector.load %arg3[%c3, %c0_15] : memref<4x64xf32, #tpu.memory_space<vmem>>, vector<1x64xf32>
    %37 = vector.shape_cast %36 : vector<1x64xf32> to vector<64xf32>
    %38 = vector.shape_cast %37 : vector<64xf32> to vector<1x1x64xf32>
    %39 = vector.broadcast %35 : vector<8x16x1xf32> to vector<8x16x64xf32>
    %40 = vector.broadcast %38 : vector<1x1x64xf32> to vector<8x16x64xf32>
    %41 = arith.mulf %39, %40 : vector<8x16x64xf32>
    %42 = arith.addf %34, %41 : vector<8x16x64xf32>
    %43 = vector.shape_cast %3 : vector<64xf32> to vector<1x1x64xf32>
    %44 = vector.broadcast %43 : vector<1x1x64xf32> to vector<8x16x64xf32>
    %45 = arith.addf %42, %44 : vector<8x16x64xf32>
    %cst_16 = arith.constant 0.000000e+00 : f32
    %46 = vector.broadcast %cst_16 : f32 to vector<8x16x64xf32>
    %47 = arith.maximumf %45, %46 : vector<8x16x64xf32>
    %c1_17 = arith.constant 1 : index
    %c1_18 = arith.constant 1 : index
    %c0_19 = arith.constant 0 : index
    %48 = vector.load %arg11[%c1_17, %c1_18, %c0_19] : memref<10x18x64xf32, #tpu.memory_space<vmem>>, vector<8x16x64xf32>
    tpu.vector_store %arg11[%c1_17, %c1_18, %c0_19], %47 {strides = array<i32>} : memref<10x18x64xf32, #tpu.memory_space<vmem>>, vector<8x16x64xf32>,
    %c0_i32 = arith.constant 0 : i32
    %49 = arith.cmpi eq, %arg1, %c0_i32 : i32
    %50 = arith.extui %49 : i1 to i32
    %c0_i32_20 = arith.constant 0 : i32
    %51 = arith.cmpi ne, %50, %c0_i32_20 : i32
    scf.if %51 {
      %c0_56 = arith.constant 0 : index
      %c1_57 = arith.constant 1 : index
      %c0_58 = arith.constant 0 : index
      %157 = vector.load %arg11[%c0_56, %c1_57, %c0_58] : memref<10x18x64xf32, #tpu.memory_space<vmem>>, vector<1x16x64xf32>
      tpu.vector_store %arg11[%c0_56, %c1_57, %c0_58], %4 {strides = array<i32>} : memref<10x18x64xf32, #tpu.memory_space<vmem>>, vector<1x16x64xf32>,
    } else {
    }
    %c0_i32_21 = arith.constant 0 : i32
    %52 = arith.cmpi sgt, %arg1, %c0_i32_21 : i32
    %53 = arith.extui %52 : i1 to i32
    %c0_i32_22 = arith.constant 0 : i32
    %54 = arith.cmpi ne, %53, %c0_i32_22 : i32
    scf.if %54 {
      %c1_i32_56 = arith.constant 1 : i32
      %157 = arith.subi %1, %c1_i32_56 : i32
      %c0_57 = arith.constant 0 : index
      %158 = arith.index_cast %157 : i32 to index
      %c0_58 = arith.constant 0 : index
      %c0_59 = arith.constant 0 : index
      %159 = vector.load %arg2[%c0_57, %158, %c0_58, %c0_59] : memref<1x16x16x4xf32, #tpu.memory_space<vmem>>, vector<1x1x16x4xf32>
      %160 = vector.shape_cast %159 : vector<1x1x16x4xf32> to vector<1x16x4xf32>
      %161 = vector.extract_strided_slice %160 {offsets = [0, 0, 0], sizes = [1, 16, 1], strides = [1, 1, 1]} : vector<1x16x4xf32> to vector<1x16x1xf32>
      %c0_60 = arith.constant 0 : index
      %c0_61 = arith.constant 0 : index
      %162 = vector.load %arg3[%c0_60, %c0_61] : memref<4x64xf32, #tpu.memory_space<vmem>>, vector<1x64xf32>
      %163 = vector.shape_cast %162 : vector<1x64xf32> to vector<64xf32>
      %164 = vector.shape_cast %163 : vector<64xf32> to vector<1x1x64xf32>
      %165 = vector.broadcast %161 : vector<1x16x1xf32> to vector<1x16x64xf32>
      %166 = vector.broadcast %164 : vector<1x1x64xf32> to vector<1x16x64xf32>
      %167 = arith.mulf %165, %166 : vector<1x16x64xf32>
      %168 = vector.extract_strided_slice %160 {offsets = [0, 0, 1], sizes = [1, 16, 1], strides = [1, 1, 1]} : vector<1x16x4xf32> to vector<1x16x1xf32>
      %c1_62 = arith.constant 1 : index
      %c0_63 = arith.constant 0 : index
      %169 = vector.load %arg3[%c1_62, %c0_63] : memref<4x64xf32, #tpu.memory_space<vmem>>, vector<1x64xf32>
      %170 = vector.shape_cast %169 : vector<1x64xf32> to vector<64xf32>
      %171 = vector.shape_cast %170 : vector<64xf32> to vector<1x1x64xf32>
      %172 = vector.broadcast %168 : vector<1x16x1xf32> to vector<1x16x64xf32>
      %173 = vector.broadcast %171 : vector<1x1x64xf32> to vector<1x16x64xf32>
      %174 = arith.mulf %172, %173 : vector<1x16x64xf32>
      %175 = arith.addf %167, %174 : vector<1x16x64xf32>
      %176 = vector.extract_strided_slice %160 {offsets = [0, 0, 2], sizes = [1, 16, 1], strides = [1, 1, 1]} : vector<1x16x4xf32> to vector<1x16x1xf32>
      %c2_64 = arith.constant 2 : index
      %c0_65 = arith.constant 0 : index
      %177 = vector.load %arg3[%c2_64, %c0_65] : memref<4x64xf32, #tpu.memory_space<vmem>>, vector<1x64xf32>
      %178 = vector.shape_cast %177 : vector<1x64xf32> to vector<64xf32>
      %179 = vector.shape_cast %178 : vector<64xf32> to vector<1x1x64xf32>
      %180 = vector.broadcast %176 : vector<1x16x1xf32> to vector<1x16x64xf32>
      %181 = vector.broadcast %179 : vector<1x1x64xf32> to vector<1x16x64xf32>
      %182 = arith.mulf %180, %181 : vector<1x16x64xf32>
      %183 = arith.addf %175, %182 : vector<1x16x64xf32>
      %184 = vector.extract_strided_slice %160 {offsets = [0, 0, 3], sizes = [1, 16, 1], strides = [1, 1, 1]} : vector<1x16x4xf32> to vector<1x16x1xf32>
      %c3_66 = arith.constant 3 : index
      %c0_67 = arith.constant 0 : index
      %185 = vector.load %arg3[%c3_66, %c0_67] : memref<4x64xf32, #tpu.memory_space<vmem>>, vector<1x64xf32>
      %186 = vector.shape_cast %185 : vector<1x64xf32> to vector<64xf32>
      %187 = vector.shape_cast %186 : vector<64xf32> to vector<1x1x64xf32>
      %188 = vector.broadcast %184 : vector<1x16x1xf32> to vector<1x16x64xf32>
      %189 = vector.broadcast %187 : vector<1x1x64xf32> to vector<1x16x64xf32>
      %190 = arith.mulf %188, %189 : vector<1x16x64xf32>
      %191 = arith.addf %183, %190 : vector<1x16x64xf32>
      %192 = vector.shape_cast %3 : vector<64xf32> to vector<1x1x64xf32>
      %193 = vector.broadcast %192 : vector<1x1x64xf32> to vector<1x16x64xf32>
      %194 = arith.addf %191, %193 : vector<1x16x64xf32>
      %cst_68 = arith.constant 0.000000e+00 : f32
      %195 = vector.broadcast %cst_68 : f32 to vector<1x16x64xf32>
      %196 = arith.maximumf %194, %195 : vector<1x16x64xf32>
      %c0_69 = arith.constant 0 : index
      %c1_70 = arith.constant 1 : index
      %c0_71 = arith.constant 0 : index
      %197 = vector.load %arg11[%c0_69, %c1_70, %c0_71] : memref<10x18x64xf32, #tpu.memory_space<vmem>>, vector<1x16x64xf32>
      tpu.vector_store %arg11[%c0_69, %c1_70, %c0_71], %196 {strides = array<i32>} : memref<10x18x64xf32, #tpu.memory_space<vmem>>, vector<1x16x64xf32>,
    } else {
    }
    %c1_i32 = arith.constant 1 : i32
    %55 = arith.cmpi eq, %arg1, %c1_i32 : i32
    %56 = arith.extui %55 : i1 to i32
    %c0_i32_23 = arith.constant 0 : i32
    %57 = arith.cmpi ne, %56, %c0_i32_23 : i32
    scf.if %57 {
      %c9 = arith.constant 9 : index
      %c1_56 = arith.constant 1 : index
      %c0_57 = arith.constant 0 : index
      %157 = vector.load %arg11[%c9, %c1_56, %c0_57] : memref<10x18x64xf32, #tpu.memory_space<vmem>>, vector<1x16x64xf32>
      tpu.vector_store %arg11[%c9, %c1_56, %c0_57], %4 {strides = array<i32>} : memref<10x18x64xf32, #tpu.memory_space<vmem>>, vector<1x16x64xf32>,
    } else {
    }
    %c1_i32_24 = arith.constant 1 : i32
    %58 = arith.cmpi slt, %arg1, %c1_i32_24 : i32
    %59 = arith.extui %58 : i1 to i32
    %c0_i32_25 = arith.constant 0 : i32
    %60 = arith.cmpi ne, %59, %c0_i32_25 : i32
    scf.if %60 {
      %c8_i32_56 = arith.constant 8 : i32
      %157 = arith.addi %1, %c8_i32_56 : i32
      %c0_57 = arith.constant 0 : index
      %158 = arith.index_cast %157 : i32 to index
      %c0_58 = arith.constant 0 : index
      %c0_59 = arith.constant 0 : index
      %159 = vector.load %arg2[%c0_57, %158, %c0_58, %c0_59] : memref<1x16x16x4xf32, #tpu.memory_space<vmem>>, vector<1x1x16x4xf32>
      %160 = vector.shape_cast %159 : vector<1x1x16x4xf32> to vector<1x16x4xf32>
      %161 = vector.extract_strided_slice %160 {offsets = [0, 0, 0], sizes = [1, 16, 1], strides = [1, 1, 1]} : vector<1x16x4xf32> to vector<1x16x1xf32>
      %c0_60 = arith.constant 0 : index
      %c0_61 = arith.constant 0 : index
      %162 = vector.load %arg3[%c0_60, %c0_61] : memref<4x64xf32, #tpu.memory_space<vmem>>, vector<1x64xf32>
      %163 = vector.shape_cast %162 : vector<1x64xf32> to vector<64xf32>
      %164 = vector.shape_cast %163 : vector<64xf32> to vector<1x1x64xf32>
      %165 = vector.broadcast %161 : vector<1x16x1xf32> to vector<1x16x64xf32>
      %166 = vector.broadcast %164 : vector<1x1x64xf32> to vector<1x16x64xf32>
      %167 = arith.mulf %165, %166 : vector<1x16x64xf32>
      %168 = vector.extract_strided_slice %160 {offsets = [0, 0, 1], sizes = [1, 16, 1], strides = [1, 1, 1]} : vector<1x16x4xf32> to vector<1x16x1xf32>
      %c1_62 = arith.constant 1 : index
      %c0_63 = arith.constant 0 : index
      %169 = vector.load %arg3[%c1_62, %c0_63] : memref<4x64xf32, #tpu.memory_space<vmem>>, vector<1x64xf32>
      %170 = vector.shape_cast %169 : vector<1x64xf32> to vector<64xf32>
      %171 = vector.shape_cast %170 : vector<64xf32> to vector<1x1x64xf32>
      %172 = vector.broadcast %168 : vector<1x16x1xf32> to vector<1x16x64xf32>
      %173 = vector.broadcast %171 : vector<1x1x64xf32> to vector<1x16x64xf32>
      %174 = arith.mulf %172, %173 : vector<1x16x64xf32>
      %175 = arith.addf %167, %174 : vector<1x16x64xf32>
      %176 = vector.extract_strided_slice %160 {offsets = [0, 0, 2], sizes = [1, 16, 1], strides = [1, 1, 1]} : vector<1x16x4xf32> to vector<1x16x1xf32>
      %c2_64 = arith.constant 2 : index
      %c0_65 = arith.constant 0 : index
      %177 = vector.load %arg3[%c2_64, %c0_65] : memref<4x64xf32, #tpu.memory_space<vmem>>, vector<1x64xf32>
      %178 = vector.shape_cast %177 : vector<1x64xf32> to vector<64xf32>
      %179 = vector.shape_cast %178 : vector<64xf32> to vector<1x1x64xf32>
      %180 = vector.broadcast %176 : vector<1x16x1xf32> to vector<1x16x64xf32>
      %181 = vector.broadcast %179 : vector<1x1x64xf32> to vector<1x16x64xf32>
      %182 = arith.mulf %180, %181 : vector<1x16x64xf32>
      %183 = arith.addf %175, %182 : vector<1x16x64xf32>
      %184 = vector.extract_strided_slice %160 {offsets = [0, 0, 3], sizes = [1, 16, 1], strides = [1, 1, 1]} : vector<1x16x4xf32> to vector<1x16x1xf32>
      %c3_66 = arith.constant 3 : index
      %c0_67 = arith.constant 0 : index
      %185 = vector.load %arg3[%c3_66, %c0_67] : memref<4x64xf32, #tpu.memory_space<vmem>>, vector<1x64xf32>
      %186 = vector.shape_cast %185 : vector<1x64xf32> to vector<64xf32>
      %187 = vector.shape_cast %186 : vector<64xf32> to vector<1x1x64xf32>
      %188 = vector.broadcast %184 : vector<1x16x1xf32> to vector<1x16x64xf32>
      %189 = vector.broadcast %187 : vector<1x1x64xf32> to vector<1x16x64xf32>
      %190 = arith.mulf %188, %189 : vector<1x16x64xf32>
      %191 = arith.addf %183, %190 : vector<1x16x64xf32>
      %192 = vector.shape_cast %3 : vector<64xf32> to vector<1x1x64xf32>
      %193 = vector.broadcast %192 : vector<1x1x64xf32> to vector<1x16x64xf32>
      %194 = arith.addf %191, %193 : vector<1x16x64xf32>
      %cst_68 = arith.constant 0.000000e+00 : f32
      %195 = vector.broadcast %cst_68 : f32 to vector<1x16x64xf32>
      %196 = arith.maximumf %194, %195 : vector<1x16x64xf32>
      %c9 = arith.constant 9 : index
      %c1_69 = arith.constant 1 : index
      %c0_70 = arith.constant 0 : index
      %197 = vector.load %arg11[%c9, %c1_69, %c0_70] : memref<10x18x64xf32, #tpu.memory_space<vmem>>, vector<1x16x64xf32>
      tpu.vector_store %arg11[%c9, %c1_69, %c0_70], %196 {strides = array<i32>} : memref<10x18x64xf32, #tpu.memory_space<vmem>>, vector<1x16x64xf32>,
    } else {
    }
    %c0_26 = arith.constant 0 : index
    %c0_27 = arith.constant 0 : index
    %61 = vector.load %arg5[%c0_26, %c0_27] : memref<9x64xf32, #tpu.memory_space<vmem>>, vector<9x64xf32>
    %c0_28 = arith.constant 0 : index
    %c0_29 = arith.constant 0 : index
    %c0_30 = arith.constant 0 : index
    %62 = vector.load %arg11[%c0_28, %c0_29, %c0_30] : memref<10x18x64xf32, #tpu.memory_space<vmem>>, vector<10x16x64xf32>
    %c0_31 = arith.constant 0 : index
    %c1_32 = arith.constant 1 : index
    %c0_33 = arith.constant 0 : index
    %63 = vector.load %arg11[%c0_31, %c1_32, %c0_33] : memref<10x18x64xf32, #tpu.memory_space<vmem>>, vector<10x16x64xf32>
    %c0_34 = arith.constant 0 : index
    %c2_35 = arith.constant 2 : index
    %c0_36 = arith.constant 0 : index
    %64 = vector.load %arg11[%c0_34, %c2_35, %c0_36] : memref<10x18x64xf32, #tpu.memory_space<vmem>>, vector<10x16x64xf32>
    %65 = vector.extract_strided_slice %62 {offsets = [0, 0, 0], sizes = [8, 16, 64], strides = [1, 1, 1]} : vector<10x16x64xf32> to vector<8x16x64xf32>
    %66 = vector.extract_strided_slice %61 {offsets = [0, 0], sizes = [1, 64], strides = [1, 1]} : vector<9x64xf32> to vector<1x64xf32>
    %67 = vector.shape_cast %66 : vector<1x64xf32> to vector<64xf32>
    %68 = vector.shape_cast %67 : vector<64xf32> to vector<1x1x64xf32>
    %69 = vector.broadcast %68 : vector<1x1x64xf32> to vector<8x16x64xf32>
    %70 = arith.mulf %65, %69 : vector<8x16x64xf32>
    %71 = vector.extract_strided_slice %63 {offsets = [0, 0, 0], sizes = [8, 16, 64], strides = [1, 1, 1]} : vector<10x16x64xf32> to vector<8x16x64xf32>
    %72 = vector.extract_strided_slice %61 {offsets = [1, 0], sizes = [1, 64], strides = [1, 1]} : vector<9x64xf32> to vector<1x64xf32>
    %73 = vector.shape_cast %72 : vector<1x64xf32> to vector<64xf32>
    %74 = vector.shape_cast %73 : vector<64xf32> to vector<1x1x64xf32>
    %75 = vector.broadcast %74 : vector<1x1x64xf32> to vector<8x16x64xf32>
    %76 = arith.mulf %71, %75 : vector<8x16x64xf32>
    %77 = arith.addf %70, %76 : vector<8x16x64xf32>
    %78 = vector.extract_strided_slice %64 {offsets = [0, 0, 0], sizes = [8, 16, 64], strides = [1, 1, 1]} : vector<10x16x64xf32> to vector<8x16x64xf32>
    %79 = vector.extract_strided_slice %61 {offsets = [2, 0], sizes = [1, 64], strides = [1, 1]} : vector<9x64xf32> to vector<1x64xf32>
    %80 = vector.shape_cast %79 : vector<1x64xf32> to vector<64xf32>
    %81 = vector.shape_cast %80 : vector<64xf32> to vector<1x1x64xf32>
    %82 = vector.broadcast %81 : vector<1x1x64xf32> to vector<8x16x64xf32>
    %83 = arith.mulf %78, %82 : vector<8x16x64xf32>
    %84 = arith.addf %77, %83 : vector<8x16x64xf32>
    %85 = vector.extract_strided_slice %62 {offsets = [1, 0, 0], sizes = [8, 16, 64], strides = [1, 1, 1]} : vector<10x16x64xf32> to vector<8x16x64xf32>
    %86 = vector.extract_strided_slice %61 {offsets = [3, 0], sizes = [1, 64], strides = [1, 1]} : vector<9x64xf32> to vector<1x64xf32>
    %87 = vector.shape_cast %86 : vector<1x64xf32> to vector<64xf32>
    %88 = vector.shape_cast %87 : vector<64xf32> to vector<1x1x64xf32>
    %89 = vector.broadcast %88 : vector<1x1x64xf32> to vector<8x16x64xf32>
    %90 = arith.mulf %85, %89 : vector<8x16x64xf32>
    %91 = arith.addf %84, %90 : vector<8x16x64xf32>
    %92 = vector.extract_strided_slice %63 {offsets = [1, 0, 0], sizes = [8, 16, 64], strides = [1, 1, 1]} : vector<10x16x64xf32> to vector<8x16x64xf32>
    %93 = vector.extract_strided_slice %61 {offsets = [4, 0], sizes = [1, 64], strides = [1, 1]} : vector<9x64xf32> to vector<1x64xf32>
    %94 = vector.shape_cast %93 : vector<1x64xf32> to vector<64xf32>
    %95 = vector.shape_cast %94 : vector<64xf32> to vector<1x1x64xf32>
    %96 = vector.broadcast %95 : vector<1x1x64xf32> to vector<8x16x64xf32>
    %97 = arith.mulf %92, %96 : vector<8x16x64xf32>
    %98 = arith.addf %91, %97 : vector<8x16x64xf32>
    %99 = vector.extract_strided_slice %64 {offsets = [1, 0, 0], sizes = [8, 16, 64], strides = [1, 1, 1]} : vector<10x16x64xf32> to vector<8x16x64xf32>
    %100 = vector.extract_strided_slice %61 {offsets = [5, 0], sizes = [1, 64], strides = [1, 1]} : vector<9x64xf32> to vector<1x64xf32>
    %101 = vector.shape_cast %100 : vector<1x64xf32> to vector<64xf32>
    %102 = vector.shape_cast %101 : vector<64xf32> to vector<1x1x64xf32>
    %103 = vector.broadcast %102 : vector<1x1x64xf32> to vector<8x16x64xf32>
    %104 = arith.mulf %99, %103 : vector<8x16x64xf32>
    %105 = arith.addf %98, %104 : vector<8x16x64xf32>
    %106 = vector.extract_strided_slice %62 {offsets = [2, 0, 0], sizes = [8, 16, 64], strides = [1, 1, 1]} : vector<10x16x64xf32> to vector<8x16x64xf32>
    %107 = vector.extract_strided_slice %61 {offsets = [6, 0], sizes = [1, 64], strides = [1, 1]} : vector<9x64xf32> to vector<1x64xf32>
    %108 = vector.shape_cast %107 : vector<1x64xf32> to vector<64xf32>
    %109 = vector.shape_cast %108 : vector<64xf32> to vector<1x1x64xf32>
    %110 = vector.broadcast %109 : vector<1x1x64xf32> to vector<8x16x64xf32>
    %111 = arith.mulf %106, %110 : vector<8x16x64xf32>
    %112 = arith.addf %105, %111 : vector<8x16x64xf32>
    %113 = vector.extract_strided_slice %63 {offsets = [2, 0, 0], sizes = [8, 16, 64], strides = [1, 1, 1]} : vector<10x16x64xf32> to vector<8x16x64xf32>
    %114 = vector.extract_strided_slice %61 {offsets = [7, 0], sizes = [1, 64], strides = [1, 1]} : vector<9x64xf32> to vector<1x64xf32>
    %115 = vector.shape_cast %114 : vector<1x64xf32> to vector<64xf32>
    %116 = vector.shape_cast %115 : vector<64xf32> to vector<1x1x64xf32>
    %117 = vector.broadcast %116 : vector<1x1x64xf32> to vector<8x16x64xf32>
    %118 = arith.mulf %113, %117 : vector<8x16x64xf32>
    %119 = arith.addf %112, %118 : vector<8x16x64xf32>
    %120 = vector.extract_strided_slice %64 {offsets = [2, 0, 0], sizes = [8, 16, 64], strides = [1, 1, 1]} : vector<10x16x64xf32> to vector<8x16x64xf32>
    %121 = vector.extract_strided_slice %61 {offsets = [8, 0], sizes = [1, 64], strides = [1, 1]} : vector<9x64xf32> to vector<1x64xf32>
    %122 = vector.shape_cast %121 : vector<1x64xf32> to vector<64xf32>
    %123 = vector.shape_cast %122 : vector<64xf32> to vector<1x1x64xf32>
    %124 = vector.broadcast %123 : vector<1x1x64xf32> to vector<8x16x64xf32>
    %125 = arith.mulf %120, %124 : vector<8x16x64xf32>
    %126 = arith.addf %119, %125 : vector<8x16x64xf32>
    %c0_37 = arith.constant 0 : index
    %c0_38 = arith.constant 0 : index
    %127 = vector.load %arg6[%c0_37, %c0_38] : memref<1x64xf32, #tpu.memory_space<vmem>>, vector<1x64xf32>
    %128 = vector.shape_cast %127 : vector<1x64xf32> to vector<64xf32>
    %129 = vector.shape_cast %128 : vector<64xf32> to vector<1x1x64xf32>
    %130 = vector.broadcast %129 : vector<1x1x64xf32> to vector<8x16x64xf32>
    %131 = arith.addf %126, %130 : vector<8x16x64xf32>
    %132 = vector.shape_cast %131 : vector<8x16x64xf32> to vector<128x64xf32>
    %c0_39 = arith.constant 0 : index
    %c0_40 = arith.constant 0 : index
    %133 = vector.load %arg7[%c0_39, %c0_40] : memref<64x48xf32, #tpu.memory_space<vmem>>, vector<64x48xf32>
    %cst_41 = arith.constant dense<0.000000e+00> : vector<128x48xf32>
    %134 = tpu.matmul %132, %133, %cst_41 {dimension_numbers = #tpu.dot_dimension_numbers<[1], [0], [0], [1], [0, 0, 1, 1], [], []>} : vector<128x64xf32>, vector<64x48xf32>, vector<128x48xf32> -> vector<128x48xf32>
    %c0_42 = arith.constant 0 : index
    %c0_43 = arith.constant 0 : index
    %135 = vector.load %arg8[%c0_42, %c0_43] : memref<64x48xf32, #tpu.memory_space<vmem>>, vector<64x48xf32>
    %cst_44 = arith.constant dense<0.000000e+00> : vector<128x48xf32>
    %136 = tpu.matmul %132, %135, %cst_44 {dimension_numbers = #tpu.dot_dimension_numbers<[1], [0], [0], [1], [0, 0, 1, 1], [], []>} : vector<128x64xf32>, vector<64x48xf32>, vector<128x48xf32> -> vector<128x48xf32>
    %137 = arith.mulf %132, %132 : vector<128x64xf32>
    %c0_45 = arith.constant 0 : index
    %c0_46 = arith.constant 0 : index
    %138 = vector.load %arg8[%c0_45, %c0_46] : memref<64x48xf32, #tpu.memory_space<vmem>>, vector<64x48xf32>
    %cst_47 = arith.constant dense<0.000000e+00> : vector<128x48xf32>
    %139 = tpu.matmul %137, %138, %cst_47 {dimension_numbers = #tpu.dot_dimension_numbers<[1], [0], [0], [1], [0, 0, 1, 1], [], []>} : vector<128x64xf32>, vector<64x48xf32>, vector<128x48xf32> -> vector<128x48xf32>
    %140 = arith.mulf %136, %136 : vector<128x48xf32>
    %141 = arith.subf %139, %140 : vector<128x48xf32>
    %cst_48 = arith.constant 0.000000e+00 : f32
    %142 = vector.broadcast %cst_48 : f32 to vector<128x48xf32>
    %143 = arith.maximumf %141, %142 : vector<128x48xf32>
    %cst_49 = arith.constant 9.99999974E-6 : f32
    %144 = vector.broadcast %cst_49 : f32 to vector<128x48xf32>
    %145 = arith.addf %143, %144 : vector<128x48xf32>
    %146 = math.rsqrt %145 : vector<128x48xf32>
    %147 = arith.mulf %134, %146 : vector<128x48xf32>
    %c0_50 = arith.constant 0 : index
    %c0_51 = arith.constant 0 : index
    %148 = vector.load %arg9[%c0_50, %c0_51] : memref<1x48xf32, #tpu.memory_space<vmem>>, vector<1x48xf32>
    %149 = vector.shape_cast %148 : vector<1x48xf32> to vector<48xf32>
    %150 = vector.shape_cast %149 : vector<48xf32> to vector<1x48xf32>
    %151 = vector.broadcast %150 : vector<1x48xf32> to vector<128x48xf32>
    %152 = arith.addf %147, %151 : vector<128x48xf32>
    %153 = vector.shape_cast %152 : vector<128x48xf32> to vector<8x16x48xf32>
    %c0_52 = arith.constant 0 : index
    %c0_53 = arith.constant 0 : index
    %c0_54 = arith.constant 0 : index
    %c0_55 = arith.constant 0 : index
    %154 = vector.load %arg10[%c0_52, %c0_53, %c0_54, %c0_55] : memref<1x8x16x48xf32, #tpu.memory_space<vmem>>, vector<1x8x16x48xf32>
    %155 = vector.shape_cast %154 : vector<1x8x16x48xf32> to vector<8x16x48xf32>
    %156 = vector.shape_cast %153 : vector<8x16x48xf32> to vector<1x8x16x48xf32>
    tpu.vector_store %arg10[%c0_52, %c0_53, %c0_54, %c0_55], %156 {strides = array<i32>} : memref<1x8x16x48xf32, #tpu.memory_space<vmem>>, vector<1x8x16x48xf32>,
    return
  }
  func.func @transform_0(%arg0: i32, %arg1: i32) -> (i32, i32, i32, i32) {
    %c0_i32 = arith.constant 0 : i32
    %c0_i32_0 = arith.constant 0 : i32
    %c0_i32_1 = arith.constant 0 : i32
    %c0_i32_2 = arith.constant 0 : i32
    return %arg0, %c0_i32, %c0_i32_0, %c0_i32_1 : i32, i32, i32, i32
  }
  func.func @transform_1(%arg0: i32, %arg1: i32) -> (i32, i32) {
    %c0_i32 = arith.constant 0 : i32
    %c0_i32_0 = arith.constant 0 : i32
    %c0_i32_1 = arith.constant 0 : i32
    return %c0_i32, %c0_i32_0 : i32, i32
  }
  func.func @transform_2(%arg0: i32, %arg1: i32) -> (i32, i32) {
    %c0_i32 = arith.constant 0 : i32
    %c0_i32_0 = arith.constant 0 : i32
    %c0_i32_1 = arith.constant 0 : i32
    return %c0_i32, %c0_i32_0 : i32, i32
  }
  func.func @transform_3(%arg0: i32, %arg1: i32) -> (i32, i32) {
    %c0_i32 = arith.constant 0 : i32
    %c0_i32_0 = arith.constant 0 : i32
    %c0_i32_1 = arith.constant 0 : i32
    return %c0_i32, %c0_i32_0 : i32, i32
  }
  func.func @transform_4(%arg0: i32, %arg1: i32) -> (i32, i32) {
    %c0_i32 = arith.constant 0 : i32
    %c0_i32_0 = arith.constant 0 : i32
    %c0_i32_1 = arith.constant 0 : i32
    return %c0_i32, %c0_i32_0 : i32, i32
  }
  func.func @transform_5(%arg0: i32, %arg1: i32) -> (i32, i32) {
    %c0_i32 = arith.constant 0 : i32
    %c0_i32_0 = arith.constant 0 : i32
    %c0_i32_1 = arith.constant 0 : i32
    return %c0_i32, %c0_i32_0 : i32, i32
  }
  func.func @transform_6(%arg0: i32, %arg1: i32) -> (i32, i32) {
    %c0_i32 = arith.constant 0 : i32
    %c0_i32_0 = arith.constant 0 : i32
    %c0_i32_1 = arith.constant 0 : i32
    return %c0_i32, %c0_i32_0 : i32, i32
  }
  func.func @transform_7(%arg0: i32, %arg1: i32) -> (i32, i32) {
    %c0_i32 = arith.constant 0 : i32
    %c0_i32_0 = arith.constant 0 : i32
    %c0_i32_1 = arith.constant 0 : i32
    return %c0_i32, %c0_i32_0 : i32, i32
  }
  func.func @transform_8(%arg0: i32, %arg1: i32) -> (i32, i32, i32, i32) {
    %c0_i32 = arith.constant 0 : i32
    %c0_i32_0 = arith.constant 0 : i32
    %c0_i32_1 = arith.constant 0 : i32
    return %arg0, %arg1, %c0_i32, %c0_i32_0 : i32, i32, i32, i32
  }
}

</mosaic_0001>

<llo_original>
// kernel: tpu_custom_call.1
$region0: #{tpu_custom_call.1}
  #allocation0 [shape = 'u32[]', space=smem, size = 0x4, offset = 0x4, fixed_abs, tag = 'smem constant byte address 0x4 - core index']
  #allocation1 [shape = 'u32[72,128]{1,0:T(1,128)}', space=vmem, size = 0x9000, scoped, tag = 'internal scratch']
  #allocation2 [shape = 'f32[10,18,64]{2,1,0:T(8,128)}', space=vmem, size = 0x1e000, scoped, tag = 'scratch operand']
  %s0 = inlined_call_operand.vmem [shape: f32[2,16,16,4], index: 0, kind: input, shape index: {}]
  %s1 = inlined_call_operand.vmem [shape: f32[4,64], index: 1, kind: input, shape index: {}]
  %s2 = inlined_call_operand.vmem [shape: f32[1,64], index: 2, kind: input, shape index: {}]
  %s3 = inlined_call_operand.vmem [shape: f32[9,64], index: 3, kind: input, shape index: {}]
  %s4 = inlined_call_operand.vmem [shape: f32[1,64], index: 4, kind: input, shape index: {}]
  %s5 = inlined_call_operand.vmem [shape: f32[64,48], index: 5, kind: input, shape index: {}]
  %s6 = inlined_call_operand.vmem [shape: f32[64,48], index: 6, kind: input, shape index: {}]
  %s7 = inlined_call_operand.vmem [shape: f32[1,48], index: 7, kind: input, shape index: {}]
  %s8 = inlined_call_operand.hbm [shape: f32[2,16,16,48], index: 8, kind: output, shape index: {}]
  %s9 = sld [smem:[#allocation0]]
  $region81: #{tpu_custom_call.1} parent=0
    _
  %s11 = ssub.s32 1, %s9
  %s12 = scalar_select 0, %s11, %s9
  $region1: #{tpu_custom_call.1} parent=0
    #allocation3 [shape = 'u8[131072]{0}', space=vmem, size = 0x20000, scoped, tag = 'output window, operand 0']
    #allocation4 [shape = 's32[2]{0}', space=sflag, size = 0x8, scoped, tag = 'scoped memory for tpu_custom_call.1']
    %13 = vsyncpa [#allocation4], 0
    %s14 = scalar_lea.sflag [#allocation4], 1
    %15 = vsyncpa %s14, 0
    loop: start=0, step=1, limit=6
    $region2: #{tpu_custom_call.1} parent=1 // loop_pre_header
      _
    $region3: #{tpu_custom_call.1} parent=1 // loop_header
      %s17 = sphi 0, %s21
      %p18 = scmp.ge.s32.totalorder %s17, 6
      %s24 = sphi 0, %s36
      %s25 = sphi 0, %s32
      %s26 = sphi 0, %s24
      %s27 = sphi 0, %s25
      %s28 = sphi 0, %s26
      %s29 = sphi 0, %s27
      %s39 = sphi 0, %s41
      %s42 = sphi 0, %s39
      %s43 = sphi 0, %s42
      %s59 = sphi 0, %s43
      %s63 = sphi 0, %s63
      %s65 = sphi 0, %s63
      %s66 = sphi 0, %s65
      %s80 = sphi 0, %s66
      %s84 = sphi 0, %s84
      %s86 = sphi 0, %s84
      %s87 = sphi 0, %s86
      %s101 = sphi 0, %s87
      %s105 = sphi 0, %s105
      %s107 = sphi 0, %s105
      %s108 = sphi 0, %s107
      %s122 = sphi 0, %s108
      %s126 = sphi 0, %s126
      %s128 = sphi 0, %s126
      %s129 = sphi 0, %s128
      %s143 = sphi 0, %s129
      %s147 = sphi 0, %s147
      %s149 = sphi 0, %s147
      %s150 = sphi 0, %s149
      %s164 = sphi 0, %s150
      %s168 = sphi 0, %s168
      %s170 = sphi 0, %s168
      %s171 = sphi 0, %s170
      %s185 = sphi 0, %s171
      %s189 = sphi 0, %s189
      %s191 = sphi 0, %s189
      %s192 = sphi 0, %s191
      %s206 = sphi 0, %s192
      %s214 = sphi 0, %s216
      %s217 = sphi 0, %s214
      %s218 = sphi 0, %s217
      %s234 = sphi 0, %s218
    $region4: #{tpu_custom_call.1} parent=1 // loop_header_branch
      %20 = sbr.rel (%p18) target = $region8
    $region5: #{tpu_custom_call.1} parent=1 // loop_body
      %s22 = ssub.s32 %s17, 1
      %s23 = ssub.s32 %s17, 2
      %s30 = sadd.s32 1, %s25
      %p31 = scmp.ge.s32.totalorder %s30, 2
      %s32 = scalar_select %p31, 0, %s30
      %s33 = sadd.s32 1, %s24
      %s34 = scalar_select %p31, %s33, %s24
      %p35 = scmp.ge.s32.totalorder %s34, 2
      %s36 = scalar_select %p35, 0, %s34
      %s37 = ssub.s32 %s24, %s36
      %p38 = scmp.eq.s32.totalorder %s37, 0
      %s40 = sadd.s32 %s39, 1
      %s41 = scalar_select %p38, %s39, %s40
      %p44 = pneg %p38
      %p45 = scmp.eq.s32.totalorder %s17, 3
      %p46 = por %p44, %p45
      %p47 = scmp.ne.s32.totalorder %s39, %s42
      %p48 = scmp.eq.s32.totalorder %s17, 0
      %p49 = por %p47, %p48
      %p50 = scmp.ne.s32.totalorder %s39, %s42
      %p51 = scmp.eq.s32.totalorder %s22, 3
      %p52 = por %p50, %p51
      %p53 = scmp.ne.s32.totalorder %s42, %s43
      %p54 = scmp.eq.s32.totalorder %s22, 0
      %p55 = por %p53, %p54
      %p56 = scmp.ne.s32.totalorder %s42, %s43
      %p57 = scmp.eq.s32.totalorder %s23, 3
      %p58 = por %p56, %p57
      %p60 = scmp.ne.s32.totalorder %s43, %s59
      %p61 = scmp.eq.s32.totalorder %s23, 0
      %p62 = por %p60, %p61
      %s64 = sadd.s32 %s63, 1
      %p67 = scmp.eq.s32.totalorder %s17, 3
      %p68 = scmp.ne.s32.totalorder %s63, %s65
      %p69 = scmp.eq.s32.totalorder %s17, 0
      %p70 = por %p68, %p69
      %p71 = scmp.ne.s32.totalorder %s63, %s65
      %p72 = scmp.eq.s32.totalorder %s22, 3
      %p73 = por %p71, %p72
      %p74 = scmp.ne.s32.totalorder %s65, %s66
      %p75 = scmp.eq.s32.totalorder %s22, 0
      %p76 = por %p74, %p75
      %p77 = scmp.ne.s32.totalorder %s65, %s66
      %p78 = scmp.eq.s32.totalorder %s23, 3
      %p79 = por %p77, %p78
      %p81 = scmp.ne.s32.totalorder %s66, %s80
      %p82 = scmp.eq.s32.totalorder %s23, 0
      %p83 = por %p81, %p82
      %s85 = sadd.s32 %s84, 1
      %p88 = scmp.eq.s32.totalorder %s17, 3
      %p89 = scmp.ne.s32.totalorder %s84, %s86
      %p90 = scmp.eq.s32.totalorder %s17, 0
      %p91 = por %p89, %p90
      %p92 = scmp.ne.s32.totalorder %s84, %s86
      %p93 = scmp.eq.s32.totalorder %s22, 3
      %p94 = por %p92, %p93
      %p95 = scmp.ne.s32.totalorder %s86, %s87
      %p96 = scmp.eq.s32.totalorder %s22, 0
      %p97 = por %p95, %p96
      %p98 = scmp.ne.s32.totalorder %s86, %s87
      %p99 = scmp.eq.s32.totalorder %s23, 3
      %p100 = por %p98, %p99
      %p102 = scmp.ne.s32.totalorder %s87, %s101
      %p103 = scmp.eq.s32.totalorder %s23, 0
      %p104 = por %p102, %p103
      %s106 = sadd.s32 %s105, 1
      %p109 = scmp.eq.s32.totalorder %s17, 3
      %p110 = scmp.ne.s32.totalorder %s105, %s107
      %p111 = scmp.eq.s32.totalorder %s17, 0
      %p112 = por %p110, %p111
      %p113 = scmp.ne.s32.totalorder %s105, %s107
      %p114 = scmp.eq.s32.totalorder %s22, 3
      %p115 = por %p113, %p114
      %p116 = scmp.ne.s32.totalorder %s107, %s108
      %p117 = scmp.eq.s32.totalorder %s22, 0
      %p118 = por %p116, %p117
      %p119 = scmp.ne.s32.totalorder %s107, %s108
      %p120 = scmp.eq.s32.totalorder %s23, 3
      %p121 = por %p119, %p120
      %p123 = scmp.ne.s32.totalorder %s108, %s122
      %p124 = scmp.eq.s32.totalorder %s23, 0
      %p125 = por %p123, %p124
      %s127 = sadd.s32 %s126, 1
      %p130 = scmp.eq.s32.totalorder %s17, 3
      %p131 = scmp.ne.s32.totalorder %s126, %s128
      %p132 = scmp.eq.s32.totalorder %s17, 0
      %p133 = por %p131, %p132
      %p134 = scmp.ne.s32.totalorder %s126, %s128
      %p135 = scmp.eq.s32.totalorder %s22, 3
      %p136 = por %p134, %p135
      %p137 = scmp.ne.s32.totalorder %s128, %s129
      %p138 = scmp.eq.s32.totalorder %s22, 0
      %p139 = por %p137, %p138
      %p140 = scmp.ne.s32.totalorder %s128, %s129
      %p141 = scmp.eq.s32.totalorder %s23, 3
      %p142 = por %p140, %p141
      %p144 = scmp.ne.s32.totalorder %s129, %s143
      %p145 = scmp.eq.s32.totalorder %s23, 0
      %p146 = por %p144, %p145
      %s148 = sadd.s32 %s147, 1
      %p151 = scmp.eq.s32.totalorder %s17, 3
      %p152 = scmp.ne.s32.totalorder %s147, %s149
      %p153 = scmp.eq.s32.totalorder %s17, 0
      %p154 = por %p152, %p153
      %p155 = scmp.ne.s32.totalorder %s147, %s149
      %p156 = scmp.eq.s32.totalorder %s22, 3
      %p157 = por %p155, %p156
      %p158 = scmp.ne.s32.totalorder %s149, %s150
      %p159 = scmp.eq.s32.totalorder %s22, 0
      %p160 = por %p158, %p159
      %p161 = scmp.ne.s32.totalorder %s149, %s150
      %p162 = scmp.eq.s32.totalorder %s23, 3
      %p163 = por %p161, %p162
      %p165 = scmp.ne.s32.totalorder %s150, %s164
      %p166 = scmp.eq.s32.totalorder %s23, 0
      %p167 = por %p165, %p166
      %s169 = sadd.s32 %s168, 1
      %p172 = scmp.eq.s32.totalorder %s17, 3
      %p173 = scmp.ne.s32.totalorder %s168, %s170
      %p174 = scmp.eq.s32.totalorder %s17, 0
      %p175 = por %p173, %p174
      %p176 = scmp.ne.s32.totalorder %s168, %s170
      %p177 = scmp.eq.s32.totalorder %s22, 3
      %p178 = por %p176, %p177
      %p179 = scmp.ne.s32.totalorder %s170, %s171
      %p180 = scmp.eq.s32.totalorder %s22, 0
      %p181 = por %p179, %p180
      %p182 = scmp.ne.s32.totalorder %s170, %s171
      %p183 = scmp.eq.s32.totalorder %s23, 3
      %p184 = por %p182, %p183
      %p186 = scmp.ne.s32.totalorder %s171, %s185
      %p187 = scmp.eq.s32.totalorder %s23, 0
      %p188 = por %p186, %p187
      %s190 = sadd.s32 %s189, 1
      %p193 = scmp.eq.s32.totalorder %s17, 3
      %p194 = scmp.ne.s32.totalorder %s189, %s191
      %p195 = scmp.eq.s32.totalorder %s17, 0
      %p196 = por %p194, %p195
      %p197 = scmp.ne.s32.totalorder %s189, %s191
      %p198 = scmp.eq.s32.totalorder %s22, 3
      %p199 = por %p197, %p198
      %p200 = scmp.ne.s32.totalorder %s191, %s192
      %p201 = scmp.eq.s32.totalorder %s22, 0
      %p202 = por %p200, %p201
      %p203 = scmp.ne.s32.totalorder %s191, %s192
      %p204 = scmp.eq.s32.totalorder %s23, 3
      %p205 = por %p203, %p204
      %p207 = scmp.ne.s32.totalorder %s192, %s206
      %p208 = scmp.eq.s32.totalorder %s23, 0
      %p209 = por %p207, %p208
      %s210 = ssub.s32 %s24, %s36
      %s211 = ssub.s32 %s25, %s32
      %s212 = sor.u32 %s210, %s211
      %p213 = scmp.eq.s32.totalorder %s212, 0
      %s215 = sadd.s32 %s214, 1
      %s216 = scalar_select %p213, %s214, %s215
      %p219 = pneg %p213
      %p220 = scmp.eq.s32.totalorder %s17, 3
      %p221 = por %p219, %p220
      %p222 = scmp.ne.s32.totalorder %s214, %s217
      %p223 = scmp.eq.s32.totalorder %s17, 0
      %p224 = por %p222, %p223
      %p225 = scmp.ne.s32.totalorder %s214, %s217
      %p226 = scmp.eq.s32.totalorder %s22, 3
      %p227 = por %p225, %p226
      %p228 = scmp.ne.s32.totalorder %s217, %s218
      %p229 = scmp.eq.s32.totalorder %s22, 0
      %p230 = por %p228, %p229
      %p231 = scmp.ne.s32.totalorder %s217, %s218
      %p232 = scmp.eq.s32.totalorder %s23, 3
      %p233 = por %p231, %p232
      %p235 = scmp.ne.s32.totalorder %s218, %s234
      %p236 = scmp.eq.s32.totalorder %s23, 0
      %p237 = por %p235, %p236
      %p238 = scmp.le.s32.totalorder 1, %s17
      %p239 = scmp.lt.s32.totalorder %s17, 5
      %p240 = pnand %p238, %p239
      %p241 = pneg %p240
      // Predicated region
      $region9: #{tpu_custom_call.1} parent=5 // pred_check
        _
      $region10: #{tpu_custom_call.1} parent=5 // pred_check_branch
        %243 = sbr.rel (%p240) target = $region12
      $region11: #{tpu_custom_call.1} parent=5 // pred_region
        %s244 = ssub.s32 %s17, 1
        // Predicated region
        $region13: #{tpu_custom_call.1} parent=11 // pred_check
          %p245 = pneg %p76
        $region14: #{tpu_custom_call.1} parent=11 // pred_check_branch
          %247 = sbr.rel (%p245) target = $region16
        $region15: #{tpu_custom_call.1} parent=11 // pred_region
          _
        $region16: #{tpu_custom_call.1} parent=11 // pred_fallthru
          _
        // Predicated region
        $region17: #{tpu_custom_call.1} parent=11 // pred_check
          %p248 = pneg %p97
        $region18: #{tpu_custom_call.1} parent=11 // pred_check_branch
          %250 = sbr.rel (%p248) target = $region20
        $region19: #{tpu_custom_call.1} parent=11 // pred_region
          _
        $region20: #{tpu_custom_call.1} parent=11 // pred_fallthru
          _
        // Predicated region
        $region21: #{tpu_custom_call.1} parent=11 // pred_check
          %p251 = pneg %p118
        $region22: #{tpu_custom_call.1} parent=11 // pred_check_branch
          %253 = sbr.rel (%p251) target = $region24
        $region23: #{tpu_custom_call.1} parent=11 // pred_region
          _
        $region24: #{tpu_custom_call.1} parent=11 // pred_fallthru
          _
        // Predicated region
        $region25: #{tpu_custom_call.1} parent=11 // pred_check
          %p254 = pneg %p139
        $region26: #{tpu_custom_call.1} parent=11 // pred_check_branch
          %256 = sbr.rel (%p254) target = $region28
        $region27: #{tpu_custom_call.1} parent=11 // pred_region
          _
        $region28: #{tpu_custom_call.1} parent=11 // pred_fallthru
          _
        // Predicated region
        $region29: #{tpu_custom_call.1} parent=11 // pred_check
          %p257 = pneg %p160
        $region30: #{tpu_custom_call.1} parent=11 // pred_check_branch
          %259 = sbr.rel (%p257) target = $region32
        $region31: #{tpu_custom_call.1} parent=11 // pred_region
          _
        $region32: #{tpu_custom_call.1} parent=11 // pred_fallthru
          _
        // Predicated region
        $region33: #{tpu_custom_call.1} parent=11 // pred_check
          %p260 = pneg %p181
        $region34: #{tpu_custom_call.1} parent=11 // pred_check_branch
          %262 = sbr.rel (%p260) target = $region36
        $region35: #{tpu_custom_call.1} parent=11 // pred_region
          _
        $region36: #{tpu_custom_call.1} parent=11 // pred_fallthru
          _
        // Predicated region
        $region37: #{tpu_custom_call.1} parent=11 // pred_check
          %p263 = pneg %p202
        $region38: #{tpu_custom_call.1} parent=11 // pred_check_branch
          %265 = sbr.rel (%p263) target = $region40
        $region39: #{tpu_custom_call.1} parent=11 // pred_region
          _
        $region40: #{tpu_custom_call.1} parent=11 // pred_fallthru
          _
      $region12: #{tpu_custom_call.1} parent=5 // pred_fallthru
        _
      %p266 = scmp.lt.s32.totalorder %s17, 4
      // Predicated region
      $region41: #{tpu_custom_call.1} parent=5 // pred_check
        %p267 = pneg %p266
      $region42: #{tpu_custom_call.1} parent=5 // pred_check_branch
        %269 = sbr.rel (%p267) target = $region44
      $region43: #{tpu_custom_call.1} parent=5 // pred_region
        // Predicated region
        $region45: #{tpu_custom_call.1} parent=43 // pred_check
          %p270 = pneg %p49
        $region46: #{tpu_custom_call.1} parent=43 // pred_check_branch
          %272 = sbr.rel (%p270) target = $region48
        $region47: #{tpu_custom_call.1} parent=43 // pred_region
          %p273 = scmp.lt.s32.totalorder %s24, 1
          %s274 = scalar_select %p273, %s24, 1
          %s275 = smul.addr %s274, 32
          %s276 = smul.addr %s275, 8
          %s277 = scalar_lea.vmem %s0, %s276
        $region48: #{tpu_custom_call.1} parent=43 // pred_fallthru
          _
      $region44: #{tpu_custom_call.1} parent=5 // pred_fallthru
        _
      %p278 = scmp.le.s32.totalorder 1, %s17
      %p279 = scmp.lt.s32.totalorder %s17, 5
      %p280 = pnand %p278, %p279
      %p281 = pneg %p280
      // Predicated region
      $region49: #{tpu_custom_call.1} parent=5 // pred_check
        _
      $region50: #{tpu_custom_call.1} parent=5 // pred_check_branch
        %283 = sbr.rel (%p280) target = $region52
      $region51: #{tpu_custom_call.1} parent=5 // pred_region
        %s284 = ssub.s32 %s17, 1
        %p285 = scmp.lt.s32.totalorder %s26, 1
        %s286 = scalar_select %p285, %s26, 1
        %s287 = smul.addr %s286, 32
        %s288 = smul.addr %s287, 8
        %s289 = scalar_lea.vmem %s0, %s288
        %p290 = pneg %p55
        %p291 = pneg %p52
        %p292 = pneg %p76
        %p293 = pneg %p73
        %p294 = pneg %p97
        %p295 = pneg %p94
        %p296 = pneg %p118
        %p297 = pneg %p115
        %p298 = pneg %p139
        %p299 = pneg %p136
        %p300 = pneg %p160
        %p301 = pneg %p157
        %p302 = pneg %p181
        %p303 = pneg %p178
        %p304 = pneg %p202
        %p305 = pneg %p199
        %p306 = pneg %p230
        %p307 = pneg %p227
        %s308 = sand.u32 %s217, 1
        %s309 = scalar_lea.sflag [#allocation4], %s308
        %s310 = sand.u32 %s217, 1
        %s311 = smul.addr %s310, 128
        %s312 = scalar_lea.vmem [#allocation3], %s311
        %p313 = scmp.lt.s32.totalorder %s26, 1
        %s314 = scalar_select %p313, %s26, 1
        %s315 = smul.addr %s314, 32
        %s316 = smul.addr %s315, 8
        %s317 = scalar_lea.vmem %s0, %s316
        %s318 = smul.u32 8, %s27
        %s319 = smul.u32 %s27, 8
        %v320 = vld [vmem:[%s2] sm:$0x1]
        %vm321 = vcmask 516096
        %322 = vst.msk [vmem:[#allocation2] sm:$0x1] %vm321, 0.0
        %323 = vst.msk [vmem:[#allocation2 + $0x18] sm:$0x1] %vm321, 0.0
        %324 = vst.msk [vmem:[#allocation2 + $0x30] sm:$0x1] %vm321, 0.0
        %325 = vst.msk [vmem:[#allocation2 + $0x48] sm:$0x1] %vm321, 0.0
        %326 = vst.msk [vmem:[#allocation2 + $0x60] sm:$0x1] %vm321, 0.0
        %327 = vst.msk [vmem:[#allocation2 + $0x78] sm:$0x1] %vm321, 0.0
        %328 = vst.msk [vmem:[#allocation2 + $0x90] sm:$0x1] %vm321, 0.0
        %329 = vst.msk [vmem:[#allocation2 + $0xa8] sm:$0x1] %vm321, 0.0
        %330 = vst.msk [vmem:[#allocation2 + $0xc0] sm:$0x1] %vm321, 0.0
        %331 = vst.msk [vmem:[#allocation2 + $0xd8] sm:$0x1] %vm321, 0.0
        %332 = vst.msk [vmem:[#allocation2 + $0x11] sm:$0x1] %vm321, 0.0
        %333 = vst.msk [vmem:[#allocation2 + $0x29] sm:$0x1] %vm321, 0.0
        %334 = vst.msk [vmem:[#allocation2 + $0x41] sm:$0x1] %vm321, 0.0
        %335 = vst.msk [vmem:[#allocation2 + $0x59] sm:$0x1] %vm321, 0.0
        %336 = vst.msk [vmem:[#allocation2 + $0x71] sm:$0x1] %vm321, 0.0
        %337 = vst.msk [vmem:[#allocation2 + $0x89] sm:$0x1] %vm321, 0.0
        %338 = vst.msk [vmem:[#allocation2 + $0xa1] sm:$0x1] %vm321, 0.0
        %339 = vst.msk [vmem:[#allocation2 + $0xb9] sm:$0x1] %vm321, 0.0
        %340 = vst.msk [vmem:[#allocation2 + $0xd1] sm:$0x1] %vm321, 0.0
        %341 = vst.msk [vmem:[#allocation2 + $0xe9] sm:$0x1] %vm321, 0.0
        %s342 = smul.u32 %s319, 16
        %s343 = scalar_lea.vmem %s317, %s342
        %v344 = vld [vmem:[%s343] sm:$0xff]
        %v345 = vld [vmem:[%s343 + $0x8] sm:$0xff]
        %v346 = vld [vmem:[%s343 + $0x10] sm:$0xff]
        %v347 = vld [vmem:[%s343 + $0x18] sm:$0xff]
        %v348 = vld [vmem:[%s343 + $0x20] sm:$0xff]
        %v349 = vld [vmem:[%s343 + $0x28] sm:$0xff]
        %v350 = vld [vmem:[%s343 + $0x30] sm:$0xff]
        %v351 = vld [vmem:[%s343 + $0x38] sm:$0xff]
        %v352 = vld [vmem:[%s343 + $0x40] sm:$0xff]
        %v353 = vld [vmem:[%s343 + $0x48] sm:$0xff]
        %v354 = vld [vmem:[%s343 + $0x50] sm:$0xff]
        %v355 = vld [vmem:[%s343 + $0x58] sm:$0xff]
        %v356 = vld [vmem:[%s343 + $0x60] sm:$0xff]
        %v357 = vld [vmem:[%s343 + $0x68] sm:$0xff]
        %v358 = vld [vmem:[%s343 + $0x70] sm:$0xff]
        %v359 = vld [vmem:[%s343 + $0x78] sm:$0xff]
        %v360 = vld [vmem:[%s1] sm:$0x1]
        %362 = vset.pattern.permute.xlu0 0
        %363 = vperm.xlu0 %362, %v344
        %v364 = vpop.permute.xlu0 %363
        %367 = vset.pattern.permute.xlu0 0
        %368 = vperm.xlu0 %367, %v345
        %v369 = vpop.permute.xlu0 %368
        %372 = vset.pattern.permute.xlu0 0
        %373 = vperm.xlu0 %372, %v346
        %v374 = vpop.permute.xlu0 %373
        %377 = vset.pattern.permute.xlu0 0
        %378 = vperm.xlu0 %377, %v347
        %v379 = vpop.permute.xlu0 %378
        %382 = vset.pattern.permute.xlu0 0
        %383 = vperm.xlu0 %382, %v348
        %v384 = vpop.permute.xlu0 %383
        %387 = vset.pattern.permute.xlu0 0
        %388 = vperm.xlu0 %387, %v349
        %v389 = vpop.permute.xlu0 %388
        %392 = vset.pattern.permute.xlu0 0
        %393 = vperm.xlu0 %392, %v350
        %v394 = vpop.permute.xlu0 %393
        %397 = vset.pattern.permute.xlu0 0
        %398 = vperm.xlu0 %397, %v351
        %v399 = vpop.permute.xlu0 %398
        %402 = vset.pattern.permute.xlu0 0
        %403 = vperm.xlu0 %402, %v352
        %v404 = vpop.permute.xlu0 %403
        %407 = vset.pattern.permute.xlu0 0
        %408 = vperm.xlu0 %407, %v353
        %v409 = vpop.permute.xlu0 %408
        %412 = vset.pattern.permute.xlu0 0
        %413 = vperm.xlu0 %412, %v354
        %v414 = vpop.permute.xlu0 %413
        %417 = vset.pattern.permute.xlu0 0
        %418 = vperm.xlu0 %417, %v355
        %v419 = vpop.permute.xlu0 %418
        %422 = vset.pattern.permute.xlu0 0
        %423 = vperm.xlu0 %422, %v356
        %v424 = vpop.permute.xlu0 %423
        %427 = vset.pattern.permute.xlu0 0
        %428 = vperm.xlu0 %427, %v357
        %v429 = vpop.permute.xlu0 %428
        %432 = vset.pattern.permute.xlu0 0
        %433 = vperm.xlu0 %432, %v358
        %v434 = vpop.permute.xlu0 %433
        %437 = vset.pattern.permute.xlu0 0
        %438 = vperm.xlu0 %437, %v359
        %v439 = vpop.permute.xlu0 %438
        %v441 = vperm.slane %v360, 0
        %v442 = vmul.f32 %v364, %v441
        %v443 = vmul.f32 %v369, %v441
        %v444 = vmul.f32 %v374, %v441
        %v445 = vmul.f32 %v379, %v441
        %v446 = vmul.f32 %v384, %v441
        %v447 = vmul.f32 %v389, %v441
        %v448 = vmul.f32 %v394, %v441
        %v449 = vmul.f32 %v399, %v441
        %v450 = vmul.f32 %v404, %v441
        %v451 = vmul.f32 %v409, %v441
        %v452 = vmul.f32 %v414, %v441
        %v453 = vmul.f32 %v419, %v441
        %v454 = vmul.f32 %v424, %v441
        %v455 = vmul.f32 %v429, %v441
        %v456 = vmul.f32 %v434, %v441
        %v457 = vmul.f32 %v439, %v441
        %v458 = vld [vmem:[%s1 + $0x1] sm:$0x1]
        %459 = vset.pattern.permute.xlu0 1
        %460 = vperm.xlu0 %459, %v344
        %v461 = vpop.permute.xlu0 %460
        %463 = vset.pattern.permute.xlu0 1
        %464 = vperm.xlu0 %463, %v345
        %v465 = vpop.permute.xlu0 %464
        %467 = vset.pattern.permute.xlu0 1
        %468 = vperm.xlu0 %467, %v346
        %v469 = vpop.permute.xlu0 %468
        %471 = vset.pattern.permute.xlu0 1
        %472 = vperm.xlu0 %471, %v347
        %v473 = vpop.permute.xlu0 %472
        %475 = vset.pattern.permute.xlu0 1
        %476 = vperm.xlu0 %475, %v348
        %v477 = vpop.permute.xlu0 %476
        %479 = vset.pattern.permute.xlu0 1
        %480 = vperm.xlu0 %479, %v349
        %v481 = vpop.permute.xlu0 %480
        %483 = vset.pattern.permute.xlu0 1
        %484 = vperm.xlu0 %483, %v350
        %v485 = vpop.permute.xlu0 %484
        %487 = vset.pattern.permute.xlu0 1
        %488 = vperm.xlu0 %487, %v351
        %v489 = vpop.permute.xlu0 %488
        %491 = vset.pattern.permute.xlu0 1
        %492 = vperm.xlu0 %491, %v352
        %v493 = vpop.permute.xlu0 %492
        %495 = vset.pattern.permute.xlu0 1
        %496 = vperm.xlu0 %495, %v353
        %v497 = vpop.permute.xlu0 %496
        %499 = vset.pattern.permute.xlu0 1
        %500 = vperm.xlu0 %499, %v354
        %v501 = vpop.permute.xlu0 %500
        %503 = vset.pattern.permute.xlu0 1
        %504 = vperm.xlu0 %503, %v355
        %v505 = vpop.permute.xlu0 %504
        %507 = vset.pattern.permute.xlu0 1
        %508 = vperm.xlu0 %507, %v356
        %v509 = vpop.permute.xlu0 %508
        %511 = vset.pattern.permute.xlu0 1
        %512 = vperm.xlu0 %511, %v357
        %v513 = vpop.permute.xlu0 %512
        %515 = vset.pattern.permute.xlu0 1
        %516 = vperm.xlu0 %515, %v358
        %v517 = vpop.permute.xlu0 %516
        %519 = vset.pattern.permute.xlu0 1
        %520 = vperm.xlu0 %519, %v359
        %v521 = vpop.permute.xlu0 %520
        %v523 = vperm.slane %v458, 0
        %v524 = vmul.f32 %v461, %v523
        %v525 = vmul.f32 %v465, %v523
        %v526 = vmul.f32 %v469, %v523
        %v527 = vmul.f32 %v473, %v523
        %v528 = vmul.f32 %v477, %v523
        %v529 = vmul.f32 %v481, %v523
        %v530 = vmul.f32 %v485, %v523
        %v531 = vmul.f32 %v489, %v523
        %v532 = vmul.f32 %v493, %v523
        %v533 = vmul.f32 %v497, %v523
        %v534 = vmul.f32 %v501, %v523
        %v535 = vmul.f32 %v505, %v523
        %v536 = vmul.f32 %v509, %v523
        %v537 = vmul.f32 %v513, %v523
        %v538 = vmul.f32 %v517, %v523
        %v539 = vmul.f32 %v521, %v523
        %v540 = vadd.f32 %v442, %v524
        %v541 = vadd.f32 %v443, %v525
        %v542 = vadd.f32 %v444, %v526
        %v543 = vadd.f32 %v445, %v527
        %v544 = vadd.f32 %v446, %v528
        %v545 = vadd.f32 %v447, %v529
        %v546 = vadd.f32 %v448, %v530
        %v547 = vadd.f32 %v449, %v531
        %v548 = vadd.f32 %v450, %v532
        %v549 = vadd.f32 %v451, %v533
        %v550 = vadd.f32 %v452, %v534
        %v551 = vadd.f32 %v453, %v535
        %v552 = vadd.f32 %v454, %v536
        %v553 = vadd.f32 %v455, %v537
        %v554 = vadd.f32 %v456, %v538
        %v555 = vadd.f32 %v457, %v539
        %v556 = vld [vmem:[%s1 + $0x2] sm:$0x1]
        %557 = vset.pattern.permute.xlu0 2
        %558 = vperm.xlu0 %557, %v344
        %v559 = vpop.permute.xlu0 %558
        %561 = vset.pattern.permute.xlu0 2
        %562 = vperm.xlu0 %561, %v345
        %v563 = vpop.permute.xlu0 %562
        %565 = vset.pattern.permute.xlu0 2
        %566 = vperm.xlu0 %565, %v346
        %v567 = vpop.permute.xlu0 %566
        %569 = vset.pattern.permute.xlu0 2
        %570 = vperm.xlu0 %569, %v347
        %v571 = vpop.permute.xlu0 %570
        %573 = vset.pattern.permute.xlu0 2
        %574 = vperm.xlu0 %573, %v348
        %v575 = vpop.permute.xlu0 %574
        %577 = vset.pattern.permute.xlu0 2
        %578 = vperm.xlu0 %577, %v349
        %v579 = vpop.permute.xlu0 %578
        %581 = vset.pattern.permute.xlu0 2
        %582 = vperm.xlu0 %581, %v350
        %v583 = vpop.permute.xlu0 %582
        %585 = vset.pattern.permute.xlu0 2
        %586 = vperm.xlu0 %585, %v351
        %v587 = vpop.permute.xlu0 %586
        %589 = vset.pattern.permute.xlu0 2
        %590 = vperm.xlu0 %589, %v352
        %v591 = vpop.permute.xlu0 %590
        %593 = vset.pattern.permute.xlu0 2
        %594 = vperm.xlu0 %593, %v353
        %v595 = vpop.permute.xlu0 %594
        %597 = vset.pattern.permute.xlu0 2
        %598 = vperm.xlu0 %597, %v354
        %v599 = vpop.permute.xlu0 %598
        %601 = vset.pattern.permute.xlu0 2
        %602 = vperm.xlu0 %601, %v355
        %v603 = vpop.permute.xlu0 %602
        %605 = vset.pattern.permute.xlu0 2
        %606 = vperm.xlu0 %605, %v356
        %v607 = vpop.permute.xlu0 %606
        %609 = vset.pattern.permute.xlu0 2
        %610 = vperm.xlu0 %609, %v357
        %v611 = vpop.permute.xlu0 %610
        %613 = vset.pattern.permute.xlu0 2
        %614 = vperm.xlu0 %613, %v358
        %v615 = vpop.permute.xlu0 %614
        %617 = vset.pattern.permute.xlu0 2
        %618 = vperm.xlu0 %617, %v359
        %v619 = vpop.permute.xlu0 %618
        %v621 = vperm.slane %v556, 0
        %v622 = vmul.f32 %v559, %v621
        %v623 = vmul.f32 %v563, %v621
        %v624 = vmul.f32 %v567, %v621
        %v625 = vmul.f32 %v571, %v621
        %v626 = vmul.f32 %v575, %v621
        %v627 = vmul.f32 %v579, %v621
        %v628 = vmul.f32 %v583, %v621
        %v629 = vmul.f32 %v587, %v621
        %v630 = vmul.f32 %v591, %v621
        %v631 = vmul.f32 %v595, %v621
        %v632 = vmul.f32 %v599, %v621
        %v633 = vmul.f32 %v603, %v621
        %v634 = vmul.f32 %v607, %v621
        %v635 = vmul.f32 %v611, %v621
        %v636 = vmul.f32 %v615, %v621
        %v637 = vmul.f32 %v619, %v621
        %v638 = vadd.f32 %v540, %v622
        %v639 = vadd.f32 %v541, %v623
        %v640 = vadd.f32 %v542, %v624
        %v641 = vadd.f32 %v543, %v625
        %v642 = vadd.f32 %v544, %v626
        %v643 = vadd.f32 %v545, %v627
        %v644 = vadd.f32 %v546, %v628
        %v645 = vadd.f32 %v547, %v629
        %v646 = vadd.f32 %v548, %v630
        %v647 = vadd.f32 %v549, %v631
        %v648 = vadd.f32 %v550, %v632
        %v649 = vadd.f32 %v551, %v633
        %v650 = vadd.f32 %v552, %v634
        %v651 = vadd.f32 %v553, %v635
        %v652 = vadd.f32 %v554, %v636
        %v653 = vadd.f32 %v555, %v637
        %v654 = vld [vmem:[%s1 + $0x3] sm:$0x1]
        %655 = vset.pattern.permute.xlu0 3
        %656 = vperm.xlu0 %655, %v344
        %v657 = vpop.permute.xlu0 %656
        %659 = vset.pattern.permute.xlu0 3
        %660 = vperm.xlu0 %659, %v345
        %v661 = vpop.permute.xlu0 %660
        %663 = vset.pattern.permute.xlu0 3
        %664 = vperm.xlu0 %663, %v346
        %v665 = vpop.permute.xlu0 %664
        %667 = vset.pattern.permute.xlu0 3
        %668 = vperm.xlu0 %667, %v347
        %v669 = vpop.permute.xlu0 %668
        %671 = vset.pattern.permute.xlu0 3
        %672 = vperm.xlu0 %671, %v348
        %v673 = vpop.permute.xlu0 %672
        %675 = vset.pattern.permute.xlu0 3
        %676 = vperm.xlu0 %675, %v349
        %v677 = vpop.permute.xlu0 %676
        %679 = vset.pattern.permute.xlu0 3
        %680 = vperm.xlu0 %679, %v350
        %v681 = vpop.permute.xlu0 %680
        %683 = vset.pattern.permute.xlu0 3
        %684 = vperm.xlu0 %683, %v351
        %v685 = vpop.permute.xlu0 %684
        %687 = vset.pattern.permute.xlu0 3
        %688 = vperm.xlu0 %687, %v352
        %v689 = vpop.permute.xlu0 %688
        %691 = vset.pattern.permute.xlu0 3
        %692 = vperm.xlu0 %691, %v353
        %v693 = vpop.permute.xlu0 %692
        %695 = vset.pattern.permute.xlu0 3
        %696 = vperm.xlu0 %695, %v354
        %v697 = vpop.permute.xlu0 %696
        %699 = vset.pattern.permute.xlu0 3
        %700 = vperm.xlu0 %699, %v355
        %v701 = vpop.permute.xlu0 %700
        %703 = vset.pattern.permute.xlu0 3
        %704 = vperm.xlu0 %703, %v356
        %v705 = vpop.permute.xlu0 %704
        %707 = vset.pattern.permute.xlu0 3
        %708 = vperm.xlu0 %707, %v357
        %v709 = vpop.permute.xlu0 %708
        %711 = vset.pattern.permute.xlu0 3
        %712 = vperm.xlu0 %711, %v358
        %v713 = vpop.permute.xlu0 %712
        %715 = vset.pattern.permute.xlu0 3
        %716 = vperm.xlu0 %715, %v359
        %v717 = vpop.permute.xlu0 %716
        %v719 = vperm.slane %v654, 0
        %v720 = vmul.f32 %v657, %v719
        %v721 = vmul.f32 %v661, %v719
        %v722 = vmul.f32 %v665, %v719
        %v723 = vmul.f32 %v669, %v719
        %v724 = vmul.f32 %v673, %v719
        %v725 = vmul.f32 %v677, %v719
        %v726 = vmul.f32 %v681, %v719
        %v727 = vmul.f32 %v685, %v719
        %v728 = vmul.f32 %v689, %v719
        %v729 = vmul.f32 %v693, %v719
        %v730 = vmul.f32 %v697, %v719
        %v731 = vmul.f32 %v701, %v719
        %v732 = vmul.f32 %v705, %v719
        %v733 = vmul.f32 %v709, %v719
        %v734 = vmul.f32 %v713, %v719
        %v735 = vmul.f32 %v717, %v719
        %v736 = vadd.f32 %v638, %v720
        %v737 = vadd.f32 %v639, %v721
        %v738 = vadd.f32 %v640, %v722
        %v739 = vadd.f32 %v641, %v723
        %v740 = vadd.f32 %v642, %v724
        %v741 = vadd.f32 %v643, %v725
        %v742 = vadd.f32 %v644, %v726
        %v743 = vadd.f32 %v645, %v727
        %v744 = vadd.f32 %v646, %v728
        %v745 = vadd.f32 %v647, %v729
        %v746 = vadd.f32 %v648, %v730
        %v747 = vadd.f32 %v649, %v731
        %v748 = vadd.f32 %v650, %v732
        %v749 = vadd.f32 %v651, %v733
        %v750 = vadd.f32 %v652, %v734
        %v751 = vadd.f32 %v653, %v735
        %v753 = vperm.slane %v320, 0
        %v755 = vadd.f32 %v736, %v753
        %v756 = vadd.f32 %v737, %v753
        %v757 = vadd.f32 %v738, %v753
        %v758 = vadd.f32 %v739, %v753
        %v759 = vadd.f32 %v740, %v753
        %v760 = vadd.f32 %v741, %v753
        %v761 = vadd.f32 %v742, %v753
        %v762 = vadd.f32 %v743, %v753
        %v763 = vadd.f32 %v744, %v753
        %v764 = vadd.f32 %v745, %v753
        %v765 = vadd.f32 %v746, %v753
        %v766 = vadd.f32 %v747, %v753
        %v767 = vadd.f32 %v748, %v753
        %v768 = vadd.f32 %v749, %v753
        %v769 = vadd.f32 %v750, %v753
        %v770 = vadd.f32 %v751, %v753
        %v771 = vmax.f32 %v755, 0.0
        %v772 = vmax.f32 %v756, 0.0
        %v773 = vmax.f32 %v757, 0.0
        %v774 = vmax.f32 %v758, 0.0
        %v775 = vmax.f32 %v759, 0.0
        %v776 = vmax.f32 %v760, 0.0
        %v777 = vmax.f32 %v761, 0.0
        %v778 = vmax.f32 %v762, 0.0
        %v779 = vmax.f32 %v763, 0.0
        %v780 = vmax.f32 %v764, 0.0
        %v781 = vmax.f32 %v765, 0.0
        %v782 = vmax.f32 %v766, 0.0
        %v783 = vmax.f32 %v767, 0.0
        %v784 = vmax.f32 %v768, 0.0
        %v785 = vmax.f32 %v769, 0.0
        %v786 = vmax.f32 %v770, 0.0
        %s787 = scalar_lea.vmem [#allocation2], 24
        %vm788 = vcmask 523264
        %789 = vst.msk [vmem:[%s787 + $0x1] sm:$0xff] %vm788, %v771
        %790 = vst.msk [vmem:[%s787 + $0x9] sm:$0xff] %vm788, %v772
        %791 = vst.msk [vmem:[%s787 + $0x19] sm:$0xff] %vm788, %v773
        %792 = vst.msk [vmem:[%s787 + $0x21] sm:$0xff] %vm788, %v774
        %793 = vst.msk [vmem:[%s787 + $0x31] sm:$0xff] %vm788, %v775
        %794 = vst.msk [vmem:[%s787 + $0x39] sm:$0xff] %vm788, %v776
        %795 = vst.msk [vmem:[%s787 + $0x49] sm:$0xff] %vm788, %v777
        %796 = vst.msk [vmem:[%s787 + $0x51] sm:$0xff] %vm788, %v778
        %797 = vst.msk [vmem:[%s787 + $0x61] sm:$0xff] %vm788, %v779
        %798 = vst.msk [vmem:[%s787 + $0x69] sm:$0xff] %vm788, %v780
        %799 = vst.msk [vmem:[%s787 + $0x79] sm:$0xff] %vm788, %v781
        %800 = vst.msk [vmem:[%s787 + $0x81] sm:$0xff] %vm788, %v782
        %801 = vst.msk [vmem:[%s787 + $0x91] sm:$0xff] %vm788, %v783
        %802 = vst.msk [vmem:[%s787 + $0x99] sm:$0xff] %vm788, %v784
        %803 = vst.msk [vmem:[%s787 + $0xa9] sm:$0xff] %vm788, %v785
        %804 = vst.msk [vmem:[%s787 + $0xb1] sm:$0xff] %vm788, %v786
        %p805 = scmp.eq.s32.totalorder %s27, 0
        // Predicated region
        $region53: #{tpu_custom_call.1} parent=51 // pred_check
          %p806 = pneg %p805
        $region54: #{tpu_custom_call.1} parent=51 // pred_check_branch
          %808 = sbr.rel (%p806) target = $region56
        $region55: #{tpu_custom_call.1} parent=51 // pred_region
          %809 = vst.msk [vmem:[#allocation2 + $0x1] sm:$0xff] %vm788, 0.0
          %810 = vst.msk [vmem:[#allocation2 + $0x9] sm:$0xff] %vm788, 0.0
        $region56: #{tpu_custom_call.1} parent=51 // pred_fallthru
          _
        %p811 = scmp.gt.s32.totalorder %s27, 0
        // Predicated region
        $region57: #{tpu_custom_call.1} parent=51 // pred_check
          %p812 = pneg %p811
        $region58: #{tpu_custom_call.1} parent=51 // pred_check_branch
          %814 = sbr.rel (%p812) target = $region60
        $region59: #{tpu_custom_call.1} parent=51 // pred_region
          %s815 = ssub.s32 %s319, 1
          %s816 = smul.u32 %s815, 16
          %s817 = scalar_lea.vmem %s317, %s816
          %v818 = vld [vmem:[%s817] sm:$0xff]
          %v819 = vld [vmem:[%s817 + $0x8] sm:$0xff]
          %v820 = vld [vmem:[%s1] sm:$0x1]
          %822 = vset.pattern.permute.xlu0 0
          %823 = vperm.xlu0 %822, %v818
          %v824 = vpop.permute.xlu0 %823
          %827 = vset.pattern.permute.xlu0 0
          %828 = vperm.xlu0 %827, %v819
          %v829 = vpop.permute.xlu0 %828
          %v831 = vperm.slane %v820, 0
          %v832 = vmul.f32 %v824, %v831
          %v833 = vmul.f32 %v829, %v831
          %v834 = vld [vmem:[%s1 + $0x1] sm:$0x1]
          %835 = vset.pattern.permute.xlu0 1
          %836 = vperm.xlu0 %835, %v818
          %v837 = vpop.permute.xlu0 %836
          %839 = vset.pattern.permute.xlu0 1
          %840 = vperm.xlu0 %839, %v819
          %v841 = vpop.permute.xlu0 %840
          %v843 = vperm.slane %v834, 0
          %v844 = vmul.f32 %v837, %v843
          %v845 = vmul.f32 %v841, %v843
          %v846 = vadd.f32 %v832, %v844
          %v847 = vadd.f32 %v833, %v845
          %v848 = vld [vmem:[%s1 + $0x2] sm:$0x1]
          %849 = vset.pattern.permute.xlu0 2
          %850 = vperm.xlu0 %849, %v818
          %v851 = vpop.permute.xlu0 %850
          %853 = vset.pattern.permute.xlu0 2
          %854 = vperm.xlu0 %853, %v819
          %v855 = vpop.permute.xlu0 %854
          %v857 = vperm.slane %v848, 0
          %v858 = vmul.f32 %v851, %v857
          %v859 = vmul.f32 %v855, %v857
          %v860 = vadd.f32 %v846, %v858
          %v861 = vadd.f32 %v847, %v859
          %v862 = vld [vmem:[%s1 + $0x3] sm:$0x1]
          %863 = vset.pattern.permute.xlu0 3
          %864 = vperm.xlu0 %863, %v818
          %v865 = vpop.permute.xlu0 %864
          %867 = vset.pattern.permute.xlu0 3
          %868 = vperm.xlu0 %867, %v819
          %v869 = vpop.permute.xlu0 %868
          %v871 = vperm.slane %v862, 0
          %v872 = vmul.f32 %v865, %v871
          %v873 = vmul.f32 %v869, %v871
          %v874 = vadd.f32 %v860, %v872
          %v875 = vadd.f32 %v861, %v873
          %v876 = vadd.f32 %v874, %v753
          %v877 = vadd.f32 %v875, %v753
          %v878 = vmax.f32 %v876, 0.0
          %v879 = vmax.f32 %v877, 0.0
          %880 = vst.msk [vmem:[#allocation2 + $0x1] sm:$0xff] %vm788, %v878
          %881 = vst.msk [vmem:[#allocation2 + $0x9] sm:$0xff] %vm788, %v879
        $region60: #{tpu_custom_call.1} parent=51 // pred_fallthru
          _
        %p882 = scmp.eq.s32.totalorder %s27, 1
        // Predicated region
        $region61: #{tpu_custom_call.1} parent=51 // pred_check
          %p883 = pneg %p882
        $region62: #{tpu_custom_call.1} parent=51 // pred_check_branch
          %885 = sbr.rel (%p883) target = $region64
        $region63: #{tpu_custom_call.1} parent=51 // pred_region
          %s886 = scalar_lea.vmem [#allocation2], 216
          %887 = vst.msk [vmem:[%s886 + $0x1] sm:$0xff] %vm788, 0.0
          %888 = vst.msk [vmem:[%s886 + $0x9] sm:$0xff] %vm788, 0.0
        $region64: #{tpu_custom_call.1} parent=51 // pred_fallthru
          _
        %p889 = scmp.lt.s32.totalorder %s27, 1
        // Predicated region
        $region65: #{tpu_custom_call.1} parent=51 // pred_check
          %p890 = pneg %p889
        $region66: #{tpu_custom_call.1} parent=51 // pred_check_branch
          %892 = sbr.rel (%p890) target = $region68
        $region67: #{tpu_custom_call.1} parent=51 // pred_region
          %s893 = sadd.s32 %s319, 8
          %s894 = smul.u32 %s893, 16
          %s895 = scalar_lea.vmem %s317, %s894
          %v896 = vld [vmem:[%s895] sm:$0xff]
          %v897 = vld [vmem:[%s895 + $0x8] sm:$0xff]
          %v898 = vld [vmem:[%s1] sm:$0x1]
          %900 = vset.pattern.permute.xlu0 0
          %901 = vperm.xlu0 %900, %v896
          %v902 = vpop.permute.xlu0 %901
          %905 = vset.pattern.permute.xlu0 0
          %906 = vperm.xlu0 %905, %v897
          %v907 = vpop.permute.xlu0 %906
          %v909 = vperm.slane %v898, 0
          %v910 = vmul.f32 %v902, %v909
          %v911 = vmul.f32 %v907, %v909
          %v912 = vld [vmem:[%s1 + $0x1] sm:$0x1]
          %913 = vset.pattern.permute.xlu0 1
          %914 = vperm.xlu0 %913, %v896
          %v915 = vpop.permute.xlu0 %914
          %917 = vset.pattern.permute.xlu0 1
          %918 = vperm.xlu0 %917, %v897
          %v919 = vpop.permute.xlu0 %918
          %v921 = vperm.slane %v912, 0
          %v922 = vmul.f32 %v915, %v921
          %v923 = vmul.f32 %v919, %v921
          %v924 = vadd.f32 %v910, %v922
          %v925 = vadd.f32 %v911, %v923
          %v926 = vld [vmem:[%s1 + $0x2] sm:$0x1]
          %927 = vset.pattern.permute.xlu0 2
          %928 = vperm.xlu0 %927, %v896
          %v929 = vpop.permute.xlu0 %928
          %931 = vset.pattern.permute.xlu0 2
          %932 = vperm.xlu0 %931, %v897
          %v933 = vpop.permute.xlu0 %932
          %v935 = vperm.slane %v926, 0
          %v936 = vmul.f32 %v929, %v935
          %v937 = vmul.f32 %v933, %v935
          %v938 = vadd.f32 %v924, %v936
          %v939 = vadd.f32 %v925, %v937
          %v940 = vld [vmem:[%s1 + $0x3] sm:$0x1]
          %941 = vset.pattern.permute.xlu0 3
          %942 = vperm.xlu0 %941, %v896
          %v943 = vpop.permute.xlu0 %942
          %945 = vset.pattern.permute.xlu0 3
          %946 = vperm.xlu0 %945, %v897
          %v947 = vpop.permute.xlu0 %946
          %v949 = vperm.slane %v940, 0
          %v950 = vmul.f32 %v943, %v949
          %v951 = vmul.f32 %v947, %v949
          %v952 = vadd.f32 %v938, %v950
          %v953 = vadd.f32 %v939, %v951
          %v954 = vadd.f32 %v952, %v753
          %v955 = vadd.f32 %v953, %v753
          %v956 = vmax.f32 %v954, 0.0
          %v957 = vmax.f32 %v955, 0.0
          %s958 = scalar_lea.vmem [#allocation2], 216
          %959 = vst.msk [vmem:[%s958 + $0x1] sm:$0xff] %vm788, %v956
          %960 = vst.msk [vmem:[%s958 + $0x9] sm:$0xff] %vm788, %v957
        $region68: #{tpu_custom_call.1} parent=51 // pred_fallthru
          _
        %v961 = vld [vmem:[%s3] sm:$0xff]
        %v962 = vld [vmem:[%s3 + $0x8] sm:$0x1]
        %v963 = vld [vmem:[#allocation2] sm:$0xff]
        %v964 = vld [vmem:[#allocation2 + $0x8] sm:$0xff]
        %v965 = vld [vmem:[#allocation2 + $0x18] sm:$0xff]
        %v966 = vld [vmem:[#allocation2 + $0x20] sm:$0xff]
        %v967 = vld [vmem:[#allocation2 + $0x30] sm:$0xff]
        %v968 = vld [vmem:[#allocation2 + $0x38] sm:$0xff]
        %v969 = vld [vmem:[#allocation2 + $0x48] sm:$0xff]
        %v970 = vld [vmem:[#allocation2 + $0x50] sm:$0xff]
        %v971 = vld [vmem:[#allocation2 + $0x60] sm:$0xff]
        %v972 = vld [vmem:[#allocation2 + $0x68] sm:$0xff]
        %v973 = vld [vmem:[#allocation2 + $0x78] sm:$0xff]
        %v974 = vld [vmem:[#allocation2 + $0x80] sm:$0xff]
        %v975 = vld [vmem:[#allocation2 + $0x90] sm:$0xff]
        %v976 = vld [vmem:[#allocation2 + $0x98] sm:$0xff]
        %v977 = vld [vmem:[#allocation2 + $0xa8] sm:$0xff]
        %v978 = vld [vmem:[#allocation2 + $0xb0] sm:$0xff]
        %v979 = vld [vmem:[#allocation2 + $0xc0] sm:$0xff]
        %v980 = vld [vmem:[#allocation2 + $0xc8] sm:$0xff]
        %v981 = vld [vmem:[#allocation2 + $0xd8] sm:$0xff]
        %v982 = vld [vmem:[#allocation2 + $0xe0] sm:$0xff]
        %v983 = vld [vmem:[#allocation2 + $0x1] sm:$0xff]
        %v984 = vld [vmem:[#allocation2 + $0x9] sm:$0xff]
        %v985 = vld [vmem:[#allocation2 + $0x19] sm:$0xff]
        %v986 = vld [vmem:[#allocation2 + $0x21] sm:$0xff]
        %v987 = vld [vmem:[#allocation2 + $0x31] sm:$0xff]
        %v988 = vld [vmem:[#allocation2 + $0x39] sm:$0xff]
        %v989 = vld [vmem:[#allocation2 + $0x49] sm:$0xff]
        %v990 = vld [vmem:[#allocation2 + $0x51] sm:$0xff]
        %v991 = vld [vmem:[#allocation2 + $0x61] sm:$0xff]
        %v992 = vld [vmem:[#allocation2 + $0x69] sm:$0xff]
        %v993 = vld [vmem:[#allocation2 + $0x79] sm:$0xff]
        %v994 = vld [vmem:[#allocation2 + $0x81] sm:$0xff]
        %v995 = vld [vmem:[#allocation2 + $0x91] sm:$0xff]
        %v996 = vld [vmem:[#allocation2 + $0x99] sm:$0xff]
        %v997 = vld [vmem:[#allocation2 + $0xa9] sm:$0xff]
        %v998 = vld [vmem:[#allocation2 + $0xb1] sm:$0xff]
        %v999 = vld [vmem:[#allocation2 + $0xc1] sm:$0xff]
        %v1000 = vld [vmem:[#allocation2 + $0xc9] sm:$0xff]
        %v1001 = vld [vmem:[#allocation2 + $0xd9] sm:$0xff]
        %v1002 = vld [vmem:[#allocation2 + $0xe1] sm:$0xff]
        %v1003 = vld [vmem:[#allocation2 + $0x2] sm:$0xff]
        %v1004 = vld [vmem:[#allocation2 + $0xa] sm:$0xff]
        %v1005 = vld [vmem:[#allocation2 + $0x1a] sm:$0xff]
        %v1006 = vld [vmem:[#allocation2 + $0x22] sm:$0xff]
        %v1007 = vld [vmem:[#allocation2 + $0x32] sm:$0xff]
        %v1008 = vld [vmem:[#allocation2 + $0x3a] sm:$0xff]
        %v1009 = vld [vmem:[#allocation2 + $0x4a] sm:$0xff]
        %v1010 = vld [vmem:[#allocation2 + $0x52] sm:$0xff]
        %v1011 = vld [vmem:[#allocation2 + $0x62] sm:$0xff]
        %v1012 = vld [vmem:[#allocation2 + $0x6a] sm:$0xff]
        %v1013 = vld [vmem:[#allocation2 + $0x7a] sm:$0xff]
        %v1014 = vld [vmem:[#allocation2 + $0x82] sm:$0xff]
        %v1015 = vld [vmem:[#allocation2 + $0x92] sm:$0xff]
        %v1016 = vld [vmem:[#allocation2 + $0x9a] sm:$0xff]
        %v1017 = vld [vmem:[#allocation2 + $0xaa] sm:$0xff]
        %v1018 = vld [vmem:[#allocation2 + $0xb2] sm:$0xff]
        %v1019 = vld [vmem:[#allocation2 + $0xc2] sm:$0xff]
        %v1020 = vld [vmem:[#allocation2 + $0xca] sm:$0xff]
        %v1021 = vld [vmem:[#allocation2 + $0xda] sm:$0xff]
        %v1022 = vld [vmem:[#allocation2 + $0xe2] sm:$0xff]
        %v1023 = vperm.slane %v961, 0
        %v1024 = vmul.f32 %v963, %v1023
        %v1025 = vmul.f32 %v964, %v1023
        %v1026 = vmul.f32 %v965, %v1023
        %v1027 = vmul.f32 %v966, %v1023
        %v1028 = vmul.f32 %v967, %v1023
        %v1029 = vmul.f32 %v968, %v1023
        %v1030 = vmul.f32 %v969, %v1023
        %v1031 = vmul.f32 %v970, %v1023
        %v1032 = vmul.f32 %v971, %v1023
        %v1033 = vmul.f32 %v972, %v1023
        %v1034 = vmul.f32 %v973, %v1023
        %v1035 = vmul.f32 %v974, %v1023
        %v1036 = vmul.f32 %v975, %v1023
        %v1037 = vmul.f32 %v976, %v1023
        %v1038 = vmul.f32 %v977, %v1023
        %v1039 = vmul.f32 %v978, %v1023
        %v1040 = vperm.slane %v961, 1
        %v1041 = vmul.f32 %v983, %v1040
        %v1042 = vmul.f32 %v984, %v1040
        %v1043 = vmul.f32 %v985, %v1040
        %v1044 = vmul.f32 %v986, %v1040
        %v1045 = vmul.f32 %v987, %v1040
        %v1046 = vmul.f32 %v988, %v1040
        %v1047 = vmul.f32 %v989, %v1040
        %v1048 = vmul.f32 %v990, %v1040
        %v1049 = vmul.f32 %v991, %v1040
        %v1050 = vmul.f32 %v992, %v1040
        %v1051 = vmul.f32 %v993, %v1040
        %v1052 = vmul.f32 %v994, %v1040
        %v1053 = vmul.f32 %v995, %v1040
        %v1054 = vmul.f32 %v996, %v1040
        %v1055 = vmul.f32 %v997, %v1040
        %v1056 = vmul.f32 %v998, %v1040
        %v1057 = vadd.f32 %v1024, %v1041
        %v1058 = vadd.f32 %v1025, %v1042
        %v1059 = vadd.f32 %v1026, %v1043
        %v1060 = vadd.f32 %v1027, %v1044
        %v1061 = vadd.f32 %v1028, %v1045
        %v1062 = vadd.f32 %v1029, %v1046
        %v1063 = vadd.f32 %v1030, %v1047
        %v1064 = vadd.f32 %v1031, %v1048
        %v1065 = vadd.f32 %v1032, %v1049
        %v1066 = vadd.f32 %v1033, %v1050
        %v1067 = vadd.f32 %v1034, %v1051
        %v1068 = vadd.f32 %v1035, %v1052
        %v1069 = vadd.f32 %v1036, %v1053
        %v1070 = vadd.f32 %v1037, %v1054
        %v1071 = vadd.f32 %v1038, %v1055
        %v1072 = vadd.f32 %v1039, %v1056
        %v1073 = vperm.slane %v961, 2
        %v1074 = vmul.f32 %v1003, %v1073
        %v1075 = vmul.f32 %v1004, %v1073
        %v1076 = vmul.f32 %v1005, %v1073
        %v1077 = vmul.f32 %v1006, %v1073
        %v1078 = vmul.f32 %v1007, %v1073
        %v1079 = vmul.f32 %v1008, %v1073
        %v1080 = vmul.f32 %v1009, %v1073
        %v1081 = vmul.f32 %v1010, %v1073
        %v1082 = vmul.f32 %v1011, %v1073
        %v1083 = vmul.f32 %v1012, %v1073
        %v1084 = vmul.f32 %v1013, %v1073
        %v1085 = vmul.f32 %v1014, %v1073
        %v1086 = vmul.f32 %v1015, %v1073
        %v1087 = vmul.f32 %v1016, %v1073
        %v1088 = vmul.f32 %v1017, %v1073
        %v1089 = vmul.f32 %v1018, %v1073
        %v1090 = vadd.f32 %v1057, %v1074
        %v1091 = vadd.f32 %v1058, %v1075
        %v1092 = vadd.f32 %v1059, %v1076
        %v1093 = vadd.f32 %v1060, %v1077
        %v1094 = vadd.f32 %v1061, %v1078
        %v1095 = vadd.f32 %v1062, %v1079
        %v1096 = vadd.f32 %v1063, %v1080
        %v1097 = vadd.f32 %v1064, %v1081
        %v1098 = vadd.f32 %v1065, %v1082
        %v1099 = vadd.f32 %v1066, %v1083
        %v1100 = vadd.f32 %v1067, %v1084
        %v1101 = vadd.f32 %v1068, %v1085
        %v1102 = vadd.f32 %v1069, %v1086
        %v1103 = vadd.f32 %v1070, %v1087
        %v1104 = vadd.f32 %v1071, %v1088
        %v1105 = vadd.f32 %v1072, %v1089
        %v1106 = vperm.slane %v961, 3
        %v1107 = vmul.f32 %v965, %v1106
        %v1108 = vmul.f32 %v966, %v1106
        %v1109 = vmul.f32 %v967, %v1106
        %v1110 = vmul.f32 %v968, %v1106
        %v1111 = vmul.f32 %v969, %v1106
        %v1112 = vmul.f32 %v970, %v1106
        %v1113 = vmul.f32 %v971, %v1106
        %v1114 = vmul.f32 %v972, %v1106
        %v1115 = vmul.f32 %v973, %v1106
        %v1116 = vmul.f32 %v974, %v1106
        %v1117 = vmul.f32 %v975, %v1106
        %v1118 = vmul.f32 %v976, %v1106
        %v1119 = vmul.f32 %v977, %v1106
        %v1120 = vmul.f32 %v978, %v1106
        %v1121 = vmul.f32 %v979, %v1106
        %v1122 = vmul.f32 %v980, %v1106
        %v1123 = vadd.f32 %v1090, %v1107
        %v1124 = vadd.f32 %v1091, %v1108
        %v1125 = vadd.f32 %v1092, %v1109
        %v1126 = vadd.f32 %v1093, %v1110
        %v1127 = vadd.f32 %v1094, %v1111
        %v1128 = vadd.f32 %v1095, %v1112
        %v1129 = vadd.f32 %v1096, %v1113
        %v1130 = vadd.f32 %v1097, %v1114
        %v1131 = vadd.f32 %v1098, %v1115
        %v1132 = vadd.f32 %v1099, %v1116
        %v1133 = vadd.f32 %v1100, %v1117
        %v1134 = vadd.f32 %v1101, %v1118
        %v1135 = vadd.f32 %v1102, %v1119
        %v1136 = vadd.f32 %v1103, %v1120
        %v1137 = vadd.f32 %v1104, %v1121
        %v1138 = vadd.f32 %v1105, %v1122
        %v1139 = vperm.slane %v961, 4
        %v1140 = vmul.f32 %v985, %v1139
        %v1141 = vmul.f32 %v986, %v1139
        %v1142 = vmul.f32 %v987, %v1139
        %v1143 = vmul.f32 %v988, %v1139
        %v1144 = vmul.f32 %v989, %v1139
        %v1145 = vmul.f32 %v990, %v1139
        %v1146 = vmul.f32 %v991, %v1139
        %v1147 = vmul.f32 %v992, %v1139
        %v1148 = vmul.f32 %v993, %v1139
        %v1149 = vmul.f32 %v994, %v1139
        %v1150 = vmul.f32 %v995, %v1139
        %v1151 = vmul.f32 %v996, %v1139
        %v1152 = vmul.f32 %v997, %v1139
        %v1153 = vmul.f32 %v998, %v1139
        %v1154 = vmul.f32 %v999, %v1139
        %v1155 = vmul.f32 %v1000, %v1139
        %v1156 = vadd.f32 %v1123, %v1140
        %v1157 = vadd.f32 %v1124, %v1141
        %v1158 = vadd.f32 %v1125, %v1142
        %v1159 = vadd.f32 %v1126, %v1143
        %v1160 = vadd.f32 %v1127, %v1144
        %v1161 = vadd.f32 %v1128, %v1145
        %v1162 = vadd.f32 %v1129, %v1146
        %v1163 = vadd.f32 %v1130, %v1147
        %v1164 = vadd.f32 %v1131, %v1148
        %v1165 = vadd.f32 %v1132, %v1149
        %v1166 = vadd.f32 %v1133, %v1150
        %v1167 = vadd.f32 %v1134, %v1151
        %v1168 = vadd.f32 %v1135, %v1152
        %v1169 = vadd.f32 %v1136, %v1153
        %v1170 = vadd.f32 %v1137, %v1154
        %v1171 = vadd.f32 %v1138, %v1155
        %v1172 = vperm.slane %v961, 5
        %v1173 = vmul.f32 %v1005, %v1172
        %v1174 = vmul.f32 %v1006, %v1172
        %v1175 = vmul.f32 %v1007, %v1172
        %v1176 = vmul.f32 %v1008, %v1172
        %v1177 = vmul.f32 %v1009, %v1172
        %v1178 = vmul.f32 %v1010, %v1172
        %v1179 = vmul.f32 %v1011, %v1172
        %v1180 = vmul.f32 %v1012, %v1172
        %v1181 = vmul.f32 %v1013, %v1172
        %v1182 = vmul.f32 %v1014, %v1172
        %v1183 = vmul.f32 %v1015, %v1172
        %v1184 = vmul.f32 %v1016, %v1172
        %v1185 = vmul.f32 %v1017, %v1172
        %v1186 = vmul.f32 %v1018, %v1172
        %v1187 = vmul.f32 %v1019, %v1172
        %v1188 = vmul.f32 %v1020, %v1172
        %v1189 = vadd.f32 %v1156, %v1173
        %v1190 = vadd.f32 %v1157, %v1174
        %v1191 = vadd.f32 %v1158, %v1175
        %v1192 = vadd.f32 %v1159, %v1176
        %v1193 = vadd.f32 %v1160, %v1177
        %v1194 = vadd.f32 %v1161, %v1178
        %v1195 = vadd.f32 %v1162, %v1179
        %v1196 = vadd.f32 %v1163, %v1180
        %v1197 = vadd.f32 %v1164, %v1181
        %v1198 = vadd.f32 %v1165, %v1182
        %v1199 = vadd.f32 %v1166, %v1183
        %v1200 = vadd.f32 %v1167, %v1184
        %v1201 = vadd.f32 %v1168, %v1185
        %v1202 = vadd.f32 %v1169, %v1186
        %v1203 = vadd.f32 %v1170, %v1187
        %v1204 = vadd.f32 %v1171, %v1188
        %v1205 = vperm.slane %v961, 6
        %v1206 = vmul.f32 %v967, %v1205
        %v1207 = vmul.f32 %v968, %v1205
        %v1208 = vmul.f32 %v969, %v1205
        %v1209 = vmul.f32 %v970, %v1205
        %v1210 = vmul.f32 %v971, %v1205
        %v1211 = vmul.f32 %v972, %v1205
        %v1212 = vmul.f32 %v973, %v1205
        %v1213 = vmul.f32 %v974, %v1205
        %v1214 = vmul.f32 %v975, %v1205
        %v1215 = vmul.f32 %v976, %v1205
        %v1216 = vmul.f32 %v977, %v1205
        %v1217 = vmul.f32 %v978, %v1205
        %v1218 = vmul.f32 %v979, %v1205
        %v1219 = vmul.f32 %v980, %v1205
        %v1220 = vmul.f32 %v981, %v1205
        %v1221 = vmul.f32 %v982, %v1205
        %v1222 = vadd.f32 %v1189, %v1206
        %v1223 = vadd.f32 %v1190, %v1207
        %v1224 = vadd.f32 %v1191, %v1208
        %v1225 = vadd.f32 %v1192, %v1209
        %v1226 = vadd.f32 %v1193, %v1210
        %v1227 = vadd.f32 %v1194, %v1211
        %v1228 = vadd.f32 %v1195, %v1212
        %v1229 = vadd.f32 %v1196, %v1213
        %v1230 = vadd.f32 %v1197, %v1214
        %v1231 = vadd.f32 %v1198, %v1215
        %v1232 = vadd.f32 %v1199, %v1216
        %v1233 = vadd.f32 %v1200, %v1217
        %v1234 = vadd.f32 %v1201, %v1218
        %v1235 = vadd.f32 %v1202, %v1219
        %v1236 = vadd.f32 %v1203, %v1220
        %v1237 = vadd.f32 %v1204, %v1221
        %v1238 = vperm.slane %v961, 7
        %v1239 = vmul.f32 %v987, %v1238
        %v1240 = vmul.f32 %v988, %v1238
        %v1241 = vmul.f32 %v989, %v1238
        %v1242 = vmul.f32 %v990, %v1238
        %v1243 = vmul.f32 %v991, %v1238
        %v1244 = vmul.f32 %v992, %v1238
        %v1245 = vmul.f32 %v993, %v1238
        %v1246 = vmul.f32 %v994, %v1238
        %v1247 = vmul.f32 %v995, %v1238
        %v1248 = vmul.f32 %v996, %v1238
        %v1249 = vmul.f32 %v997, %v1238
        %v1250 = vmul.f32 %v998, %v1238
        %v1251 = vmul.f32 %v999, %v1238
        %v1252 = vmul.f32 %v1000, %v1238
        %v1253 = vmul.f32 %v1001, %v1238
        %v1254 = vmul.f32 %v1002, %v1238
        %v1255 = vadd.f32 %v1222, %v1239
        %v1256 = vadd.f32 %v1223, %v1240
        %v1257 = vadd.f32 %v1224, %v1241
        %v1258 = vadd.f32 %v1225, %v1242
        %v1259 = vadd.f32 %v1226, %v1243
        %v1260 = vadd.f32 %v1227, %v1244
        %v1261 = vadd.f32 %v1228, %v1245
        %v1262 = vadd.f32 %v1229, %v1246
        %v1263 = vadd.f32 %v1230, %v1247
        %v1264 = vadd.f32 %v1231, %v1248
        %v1265 = vadd.f32 %v1232, %v1249
        %v1266 = vadd.f32 %v1233, %v1250
        %v1267 = vadd.f32 %v1234, %v1251
        %v1268 = vadd.f32 %v1235, %v1252
        %v1269 = vadd.f32 %v1236, %v1253
        %v1270 = vadd.f32 %v1237, %v1254
        %v1271 = vperm.slane %v962, 0
        %v1272 = vmul.f32 %v1007, %v1271
        %v1273 = vmul.f32 %v1008, %v1271
        %v1274 = vmul.f32 %v1009, %v1271
        %v1275 = vmul.f32 %v1010, %v1271
        %v1276 = vmul.f32 %v1011, %v1271
        %v1277 = vmul.f32 %v1012, %v1271
        %v1278 = vmul.f32 %v1013, %v1271
        %v1279 = vmul.f32 %v1014, %v1271
        %v1280 = vmul.f32 %v1015, %v1271
        %v1281 = vmul.f32 %v1016, %v1271
        %v1282 = vmul.f32 %v1017, %v1271
        %v1283 = vmul.f32 %v1018, %v1271
        %v1284 = vmul.f32 %v1019, %v1271
        %v1285 = vmul.f32 %v1020, %v1271
        %v1286 = vmul.f32 %v1021, %v1271
        %v1287 = vmul.f32 %v1022, %v1271
        %v1288 = vadd.f32 %v1255, %v1272
        %v1289 = vadd.f32 %v1256, %v1273
        %v1290 = vadd.f32 %v1257, %v1274
        %v1291 = vadd.f32 %v1258, %v1275
        %v1292 = vadd.f32 %v1259, %v1276
        %v1293 = vadd.f32 %v1260, %v1277
        %v1294 = vadd.f32 %v1261, %v1278
        %v1295 = vadd.f32 %v1262, %v1279
        %v1296 = vadd.f32 %v1263, %v1280
        %v1297 = vadd.f32 %v1264, %v1281
        %v1298 = vadd.f32 %v1265, %v1282
        %v1299 = vadd.f32 %v1266, %v1283
        %v1300 = vadd.f32 %v1267, %v1284
        %v1301 = vadd.f32 %v1268, %v1285
        %v1302 = vadd.f32 %v1269, %v1286
        %v1303 = vadd.f32 %v1270, %v1287
        %v1304 = vld [vmem:[%s4] sm:$0x1]
        %v1306 = vperm.slane %v1304, 0
        %v1308 = vadd.f32 %v1288, %v1306
        %v1309 = vadd.f32 %v1289, %v1306
        %v1310 = vadd.f32 %v1290, %v1306
        %v1311 = vadd.f32 %v1291, %v1306
        %v1312 = vadd.f32 %v1292, %v1306
        %v1313 = vadd.f32 %v1293, %v1306
        %v1314 = vadd.f32 %v1294, %v1306
        %v1315 = vadd.f32 %v1295, %v1306
        %v1316 = vadd.f32 %v1296, %v1306
        %v1317 = vadd.f32 %v1297, %v1306
        %v1318 = vadd.f32 %v1298, %v1306
        %v1319 = vadd.f32 %v1299, %v1306
        %v1320 = vadd.f32 %v1300, %v1306
        %v1321 = vadd.f32 %v1301, %v1306
        %v1322 = vadd.f32 %v1302, %v1306
        %v1323 = vadd.f32 %v1303, %v1306
        %v1324 = vld [vmem:[%s5] sm:$0xff]
        %v1325 = vld [vmem:[%s5 + $0x8] sm:$0xff]
        %v1326 = vld [vmem:[%s5 + $0x10] sm:$0xff]
        %v1327 = vld [vmem:[%s5 + $0x18] sm:$0xff]
        %v1328 = vld [vmem:[%s5 + $0x20] sm:$0xff]
        %v1329 = vld [vmem:[%s5 + $0x28] sm:$0xff]
        %v1330 = vld [vmem:[%s5 + $0x30] sm:$0xff]
        %v1331 = vld [vmem:[%s5 + $0x38] sm:$0xff]
        %v1333 = vsel %vm788, %v1308, 0
        %v1336 = vsel %vm788, %v1309, 0
        %v1339 = vsel %vm788, %v1310, 0
        %v1342 = vsel %vm788, %v1311, 0
        %v1345 = vsel %vm788, %v1312, 0
        %v1348 = vsel %vm788, %v1313, 0
        %v1351 = vsel %vm788, %v1314, 0
        %v1354 = vsel %vm788, %v1315, 0
        %v1357 = vsel %vm788, %v1316, 0
        %v1360 = vsel %vm788, %v1317, 0
        %v1363 = vsel %vm788, %v1318, 0
        %v1366 = vsel %vm788, %v1319, 0
        %v1369 = vsel %vm788, %v1320, 0
        %v1372 = vsel %vm788, %v1321, 0
        %v1375 = vsel %vm788, %v1322, 0
        %v1378 = vsel %vm788, %v1323, 0
        %1380 = vmatpush.msra.mxu0 0.0
        %1381 = vmatpush.msra.mxu0 0.0
        %1382 = vmatpush.msra.mxu0 0.0
        %1383 = vmatpush.msra.mxu0 0.0
        %1384 = vmatpush.msra.mxu0 0.0
        %1385 = vmatpush.msra.mxu0 0.0
        %1386 = vmatpush.msra.mxu0 0.0
        %1387 = vmatpush.msra.mxu0 0.0
        %1388 = vmatpush.msra.mxu0 %v1331
        %1389 = vmatpush.msra.mxu0 %v1330
        %1390 = vmatpush.msra.mxu0 %v1329
        %1391 = vmatpush.msra.mxu0 %v1328
        %1392 = vmatpush.msra.mxu0 %v1327
        %1393 = vmatpush.msra.mxu0 %v1326
        %1394 = vmatpush.msra.mxu0 %v1325
        %1395 = vmatpush.msra.mxu0 %v1324
        %1396 = vmatmul.f32.gmra.mxu0 %v1333
        %v1397 = vpop.f32.mrf.mxu0
        %v1398 = vadd.f32 0.0, %v1397
        %1399 = vmatmul.f32.gmra.mxu0 %v1336
        %v1400 = vpop.f32.mrf.mxu0
        %v1401 = vadd.f32 0.0, %v1400
        %1402 = vmatmul.f32.gmra.mxu0 %v1339
        %v1403 = vpop.f32.mrf.mxu0
        %v1404 = vadd.f32 0.0, %v1403
        %1405 = vmatmul.f32.gmra.mxu0 %v1342
        %v1406 = vpop.f32.mrf.mxu0
        %v1407 = vadd.f32 0.0, %v1406
        %1408 = vmatmul.f32.gmra.mxu0 %v1345
        %v1409 = vpop.f32.mrf.mxu0
        %v1410 = vadd.f32 0.0, %v1409
        %1411 = vmatmul.f32.gmra.mxu0 %v1348
        %v1412 = vpop.f32.mrf.mxu0
        %v1413 = vadd.f32 0.0, %v1412
        %1414 = vmatmul.f32.gmra.mxu0 %v1351
        %v1415 = vpop.f32.mrf.mxu0
        %v1416 = vadd.f32 0.0, %v1415
        %1417 = vmatmul.f32.gmra.mxu0 %v1354
        %v1418 = vpop.f32.mrf.mxu0
        %v1419 = vadd.f32 0.0, %v1418
        %1420 = vmatmul.f32.gmra.mxu0 %v1357
        %v1421 = vpop.f32.mrf.mxu0
        %v1422 = vadd.f32 0.0, %v1421
        %1423 = vmatmul.f32.gmra.mxu0 %v1360
        %v1424 = vpop.f32.mrf.mxu0
        %v1425 = vadd.f32 0.0, %v1424
        %1426 = vmatmul.f32.gmra.mxu0 %v1363
        %v1427 = vpop.f32.mrf.mxu0
        %v1428 = vadd.f32 0.0, %v1427
        %1429 = vmatmul.f32.gmra.mxu0 %v1366
        %v1430 = vpop.f32.mrf.mxu0
        %v1431 = vadd.f32 0.0, %v1430
        %1432 = vmatmul.f32.gmra.mxu0 %v1369
        %v1433 = vpop.f32.mrf.mxu0
        %v1434 = vadd.f32 0.0, %v1433
        %1435 = vmatmul.f32.gmra.mxu0 %v1372
        %v1436 = vpop.f32.mrf.mxu0
        %v1437 = vadd.f32 0.0, %v1436
        %1438 = vmatmul.f32.gmra.mxu0 %v1375
        %v1439 = vpop.f32.mrf.mxu0
        %v1440 = vadd.f32 0.0, %v1439
        %1441 = vmatmul.f32.gmra.mxu0 %v1378
        %v1442 = vpop.f32.mrf.mxu0
        %v1443 = vadd.f32 0.0, %v1442
        %1444 = vdwg.mxu0
        %v1445 = vld [vmem:[%s6] sm:$0xff]
        %v1446 = vld [vmem:[%s6 + $0x8] sm:$0xff]
        %v1447 = vld [vmem:[%s6 + $0x10] sm:$0xff]
        %v1448 = vld [vmem:[%s6 + $0x18] sm:$0xff]
        %v1449 = vld [vmem:[%s6 + $0x20] sm:$0xff]
        %v1450 = vld [vmem:[%s6 + $0x28] sm:$0xff]
        %v1451 = vld [vmem:[%s6 + $0x30] sm:$0xff]
        %v1452 = vld [vmem:[%s6 + $0x38] sm:$0xff]
        %1453 = vmatpush.msra.mxu0 0.0
        %1454 = vmatpush.msra.mxu0 0.0
        %1455 = vmatpush.msra.mxu0 0.0
        %1456 = vmatpush.msra.mxu0 0.0
        %1457 = vmatpush.msra.mxu0 0.0
        %1458 = vmatpush.msra.mxu0 0.0
        %1459 = vmatpush.msra.mxu0 0.0
        %1460 = vmatpush.msra.mxu0 0.0
        %1461 = vmatpush.msra.mxu0 %v1452
        %1462 = vmatpush.msra.mxu0 %v1451
        %1463 = vmatpush.msra.mxu0 %v1450
        %1464 = vmatpush.msra.mxu0 %v1449
        %1465 = vmatpush.msra.mxu0 %v1448
        %1466 = vmatpush.msra.mxu0 %v1447
        %1467 = vmatpush.msra.mxu0 %v1446
        %1468 = vmatpush.msra.mxu0 %v1445
        %1469 = vmatmul.f32.gmra.mxu0 %v1333
        %v1470 = vpop.f32.mrf.mxu0
        %v1471 = vadd.f32 0.0, %v1470
        %1472 = vmatmul.f32.gmra.mxu0 %v1336
        %v1473 = vpop.f32.mrf.mxu0
        %v1474 = vadd.f32 0.0, %v1473
        %1475 = vmatmul.f32.gmra.mxu0 %v1339
        %v1476 = vpop.f32.mrf.mxu0
        %v1477 = vadd.f32 0.0, %v1476
        %1478 = vmatmul.f32.gmra.mxu0 %v1342
        %v1479 = vpop.f32.mrf.mxu0
        %v1480 = vadd.f32 0.0, %v1479
        %1481 = vmatmul.f32.gmra.mxu0 %v1345
        %v1482 = vpop.f32.mrf.mxu0
        %v1483 = vadd.f32 0.0, %v1482
        %1484 = vmatmul.f32.gmra.mxu0 %v1348
        %v1485 = vpop.f32.mrf.mxu0
        %v1486 = vadd.f32 0.0, %v1485
        %1487 = vmatmul.f32.gmra.mxu0 %v1351
        %v1488 = vpop.f32.mrf.mxu0
        %v1489 = vadd.f32 0.0, %v1488
        %1490 = vmatmul.f32.gmra.mxu0 %v1354
        %v1491 = vpop.f32.mrf.mxu0
        %v1492 = vadd.f32 0.0, %v1491
        %1493 = vmatmul.f32.gmra.mxu0 %v1357
        %v1494 = vpop.f32.mrf.mxu0
        %v1495 = vadd.f32 0.0, %v1494
        %1496 = vmatmul.f32.gmra.mxu0 %v1360
        %v1497 = vpop.f32.mrf.mxu0
        %v1498 = vadd.f32 0.0, %v1497
        %1499 = vmatmul.f32.gmra.mxu0 %v1363
        %v1500 = vpop.f32.mrf.mxu0
        %v1501 = vadd.f32 0.0, %v1500
        %1502 = vmatmul.f32.gmra.mxu0 %v1366
        %v1503 = vpop.f32.mrf.mxu0
        %v1504 = vadd.f32 0.0, %v1503
        %1505 = vmatmul.f32.gmra.mxu0 %v1369
        %v1506 = vpop.f32.mrf.mxu0
        %v1507 = vadd.f32 0.0, %v1506
        %1508 = vmatmul.f32.gmra.mxu0 %v1372
        %v1509 = vpop.f32.mrf.mxu0
        %v1510 = vadd.f32 0.0, %v1509
        %1511 = vmatmul.f32.gmra.mxu0 %v1375
        %v1512 = vpop.f32.mrf.mxu0
        %v1513 = vadd.f32 0.0, %v1512
        %1514 = vmatmul.f32.gmra.mxu0 %v1378
        %v1515 = vpop.f32.mrf.mxu0
        %v1516 = vadd.f32 0.0, %v1515
        %1517 = vdwg.mxu0
        %v1518 = vmul.f32 %v1308, %v1308
        %v1519 = vmul.f32 %v1309, %v1309
        %v1520 = vmul.f32 %v1310, %v1310
        %v1521 = vmul.f32 %v1311, %v1311
        %v1522 = vmul.f32 %v1312, %v1312
        %v1523 = vmul.f32 %v1313, %v1313
        %v1524 = vmul.f32 %v1314, %v1314
        %v1525 = vmul.f32 %v1315, %v1315
        %v1526 = vmul.f32 %v1316, %v1316
        %v1527 = vmul.f32 %v1317, %v1317
        %v1528 = vmul.f32 %v1318, %v1318
        %v1529 = vmul.f32 %v1319, %v1319
        %v1530 = vmul.f32 %v1320, %v1320
        %v1531 = vmul.f32 %v1321, %v1321
        %v1532 = vmul.f32 %v1322, %v1322
        %v1533 = vmul.f32 %v1323, %v1323
        %v1535 = vsel %vm788, %v1518, 0
        %v1538 = vsel %vm788, %v1519, 0
        %v1541 = vsel %vm788, %v1520, 0
        %v1544 = vsel %vm788, %v1521, 0
        %v1547 = vsel %vm788, %v1522, 0
        %v1550 = vsel %vm788, %v1523, 0
        %v1553 = vsel %vm788, %v1524, 0
        %v1556 = vsel %vm788, %v1525, 0
        %v1559 = vsel %vm788, %v1526, 0
        %v1562 = vsel %vm788, %v1527, 0
        %v1565 = vsel %vm788, %v1528, 0
        %v1568 = vsel %vm788, %v1529, 0
        %v1571 = vsel %vm788, %v1530, 0
        %v1574 = vsel %vm788, %v1531, 0
        %v1577 = vsel %vm788, %v1532, 0
        %v1580 = vsel %vm788, %v1533, 0
        %1582 = vmatpush.msra.mxu0 0.0
        %1583 = vmatpush.msra.mxu0 0.0
        %1584 = vmatpush.msra.mxu0 0.0
        %1585 = vmatpush.msra.mxu0 0.0
        %1586 = vmatpush.msra.mxu0 0.0
        %1587 = vmatpush.msra.mxu0 0.0
        %1588 = vmatpush.msra.mxu0 0.0
        %1589 = vmatpush.msra.mxu0 0.0
        %1590 = vmatpush.msra.mxu0 %v1452
        %1591 = vmatpush.msra.mxu0 %v1451
        %1592 = vmatpush.msra.mxu0 %v1450
        %1593 = vmatpush.msra.mxu0 %v1449
        %1594 = vmatpush.msra.mxu0 %v1448
        %1595 = vmatpush.msra.mxu0 %v1447
        %1596 = vmatpush.msra.mxu0 %v1446
        %1597 = vmatpush.msra.mxu0 %v1445
        %1598 = vmatmul.f32.gmra.mxu0 %v1535
        %v1599 = vpop.f32.mrf.mxu0
        %v1600 = vadd.f32 0.0, %v1599
        %1601 = vmatmul.f32.gmra.mxu0 %v1538
        %v1602 = vpop.f32.mrf.mxu0
        %v1603 = vadd.f32 0.0, %v1602
        %1604 = vmatmul.f32.gmra.mxu0 %v1541
        %v1605 = vpop.f32.mrf.mxu0
        %v1606 = vadd.f32 0.0, %v1605
        %1607 = vmatmul.f32.gmra.mxu0 %v1544
        %v1608 = vpop.f32.mrf.mxu0
        %v1609 = vadd.f32 0.0, %v1608
        %1610 = vmatmul.f32.gmra.mxu0 %v1547
        %v1611 = vpop.f32.mrf.mxu0
        %v1612 = vadd.f32 0.0, %v1611
        %1613 = vmatmul.f32.gmra.mxu0 %v1550
        %v1614 = vpop.f32.mrf.mxu0
        %v1615 = vadd.f32 0.0, %v1614
        %1616 = vmatmul.f32.gmra.mxu0 %v1553
        %v1617 = vpop.f32.mrf.mxu0
        %v1618 = vadd.f32 0.0, %v1617
        %1619 = vmatmul.f32.gmra.mxu0 %v1556
        %v1620 = vpop.f32.mrf.mxu0
        %v1621 = vadd.f32 0.0, %v1620
        %1622 = vmatmul.f32.gmra.mxu0 %v1559
        %v1623 = vpop.f32.mrf.mxu0
        %v1624 = vadd.f32 0.0, %v1623
        %1625 = vmatmul.f32.gmra.mxu0 %v1562
        %v1626 = vpop.f32.mrf.mxu0
        %v1627 = vadd.f32 0.0, %v1626
        %1628 = vmatmul.f32.gmra.mxu0 %v1565
        %v1629 = vpop.f32.mrf.mxu0
        %v1630 = vadd.f32 0.0, %v1629
        %1631 = vmatmul.f32.gmra.mxu0 %v1568
        %v1632 = vpop.f32.mrf.mxu0
        %v1633 = vadd.f32 0.0, %v1632
        %1634 = vmatmul.f32.gmra.mxu0 %v1571
        %v1635 = vpop.f32.mrf.mxu0
        %v1636 = vadd.f32 0.0, %v1635
        %1637 = vmatmul.f32.gmra.mxu0 %v1574
        %v1638 = vpop.f32.mrf.mxu0
        %v1639 = vadd.f32 0.0, %v1638
        %1640 = vmatmul.f32.gmra.mxu0 %v1577
        %v1641 = vpop.f32.mrf.mxu0
        %v1642 = vadd.f32 0.0, %v1641
        %1643 = vmatmul.f32.gmra.mxu0 %v1580
        %v1644 = vpop.f32.mrf.mxu0
        %v1645 = vadd.f32 0.0, %v1644
        %1646 = vdwg.mxu0
        %v1647 = vmul.f32 %v1471, %v1471
        %v1648 = vmul.f32 %v1474, %v1474
        %v1649 = vmul.f32 %v1477, %v1477
        %v1650 = vmul.f32 %v1480, %v1480
        %v1651 = vmul.f32 %v1483, %v1483
        %v1652 = vmul.f32 %v1486, %v1486
        %v1653 = vmul.f32 %v1489, %v1489
        %v1654 = vmul.f32 %v1492, %v1492
        %v1655 = vmul.f32 %v1495, %v1495
        %v1656 = vmul.f32 %v1498, %v1498
        %v1657 = vmul.f32 %v1501, %v1501
        %v1658 = vmul.f32 %v1504, %v1504
        %v1659 = vmul.f32 %v1507, %v1507
        %v1660 = vmul.f32 %v1510, %v1510
        %v1661 = vmul.f32 %v1513, %v1513
        %v1662 = vmul.f32 %v1516, %v1516
        %v1663 = vsub.f32 %v1600, %v1647
        %v1664 = vsub.f32 %v1603, %v1648
        %v1665 = vsub.f32 %v1606, %v1649
        %v1666 = vsub.f32 %v1609, %v1650
        %v1667 = vsub.f32 %v1612, %v1651
        %v1668 = vsub.f32 %v1615, %v1652
        %v1669 = vsub.f32 %v1618, %v1653
        %v1670 = vsub.f32 %v1621, %v1654
        %v1671 = vsub.f32 %v1624, %v1655
        %v1672 = vsub.f32 %v1627, %v1656
        %v1673 = vsub.f32 %v1630, %v1657
        %v1674 = vsub.f32 %v1633, %v1658
        %v1675 = vsub.f32 %v1636, %v1659
        %v1676 = vsub.f32 %v1639, %v1660
        %v1677 = vsub.f32 %v1642, %v1661
        %v1678 = vsub.f32 %v1645, %v1662
        %v1679 = vmax.f32 %v1663, 0.0
        %v1680 = vmax.f32 %v1664, 0.0
        %v1681 = vmax.f32 %v1665, 0.0
        %v1682 = vmax.f32 %v1666, 0.0
        %v1683 = vmax.f32 %v1667, 0.0
        %v1684 = vmax.f32 %v1668, 0.0
        %v1685 = vmax.f32 %v1669, 0.0
        %v1686 = vmax.f32 %v1670, 0.0
        %v1687 = vmax.f32 %v1671, 0.0
        %v1688 = vmax.f32 %v1672, 0.0
        %v1689 = vmax.f32 %v1673, 0.0
        %v1690 = vmax.f32 %v1674, 0.0
        %v1691 = vmax.f32 %v1675, 0.0
        %v1692 = vmax.f32 %v1676, 0.0
        %v1693 = vmax.f32 %v1677, 0.0
        %v1694 = vmax.f32 %v1678, 0.0
        %v1695 = vadd.f32 %v1679, 1e-05
        %v1696 = vadd.f32 %v1680, 1e-05
        %v1697 = vadd.f32 %v1681, 1e-05
        %v1698 = vadd.f32 %v1682, 1e-05
        %v1699 = vadd.f32 %v1683, 1e-05
        %v1700 = vadd.f32 %v1684, 1e-05
        %v1701 = vadd.f32 %v1685, 1e-05
        %v1702 = vadd.f32 %v1686, 1e-05
        %v1703 = vadd.f32 %v1687, 1e-05
        %v1704 = vadd.f32 %v1688, 1e-05
        %v1705 = vadd.f32 %v1689, 1e-05
        %v1706 = vadd.f32 %v1690, 1e-05
        %v1707 = vadd.f32 %v1691, 1e-05
        %v1708 = vadd.f32 %v1692, 1e-05
        %v1709 = vadd.f32 %v1693, 1e-05
        %v1710 = vadd.f32 %v1694, 1e-05
        %v1711 = vrsqrt.pop %v1695
        %v1712 = vmul.f32 %v1711, %v1695
        %v1713 = vmul.f32 %v1712, %v1711
        %v1714 = vmul.f32 0.5, %v1713
        %v1715 = vsub.f32 1.5, %v1714
        %v1716 = vmul.f32 %v1711, %v1715
        %vm1717 = vweird.f32 %v1695
        %vm1718 = vweird.f32 %v1711
        %vm1719 = vmor %vm1717, %vm1718
        %v1720 = vsel %vm1719, %v1711, %v1716
        %v1721 = vrsqrt.pop %v1696
        %v1722 = vmul.f32 %v1721, %v1696
        %v1723 = vmul.f32 %v1722, %v1721
        %v1724 = vmul.f32 0.5, %v1723
        %v1725 = vsub.f32 1.5, %v1724
        %v1726 = vmul.f32 %v1721, %v1725
        %vm1727 = vweird.f32 %v1696
        %vm1728 = vweird.f32 %v1721
        %vm1729 = vmor %vm1727, %vm1728
        %v1730 = vsel %vm1729, %v1721, %v1726
        %v1731 = vrsqrt.pop %v1697
        %v1732 = vmul.f32 %v1731, %v1697
        %v1733 = vmul.f32 %v1732, %v1731
        %v1734 = vmul.f32 0.5, %v1733
        %v1735 = vsub.f32 1.5, %v1734
        %v1736 = vmul.f32 %v1731, %v1735
        %vm1737 = vweird.f32 %v1697
        %vm1738 = vweird.f32 %v1731
        %vm1739 = vmor %vm1737, %vm1738
        %v1740 = vsel %vm1739, %v1731, %v1736
        %v1741 = vrsqrt.pop %v1698
        %v1742 = vmul.f32 %v1741, %v1698
        %v1743 = vmul.f32 %v1742, %v1741
        %v1744 = vmul.f32 0.5, %v1743
        %v1745 = vsub.f32 1.5, %v1744
        %v1746 = vmul.f32 %v1741, %v1745
        %vm1747 = vweird.f32 %v1698
        %vm1748 = vweird.f32 %v1741
        %vm1749 = vmor %vm1747, %vm1748
        %v1750 = vsel %vm1749, %v1741, %v1746
        %v1751 = vrsqrt.pop %v1699
        %v1752 = vmul.f32 %v1751, %v1699
        %v1753 = vmul.f32 %v1752, %v1751
        %v1754 = vmul.f32 0.5, %v1753
        %v1755 = vsub.f32 1.5, %v1754
        %v1756 = vmul.f32 %v1751, %v1755
        %vm1757 = vweird.f32 %v1699
        %vm1758 = vweird.f32 %v1751
        %vm1759 = vmor %vm1757, %vm1758
        %v1760 = vsel %vm1759, %v1751, %v1756
        %v1761 = vrsqrt.pop %v1700
        %v1762 = vmul.f32 %v1761, %v1700
        %v1763 = vmul.f32 %v1762, %v1761
        %v1764 = vmul.f32 0.5, %v1763
        %v1765 = vsub.f32 1.5, %v1764
        %v1766 = vmul.f32 %v1761, %v1765
        %vm1767 = vweird.f32 %v1700
        %vm1768 = vweird.f32 %v1761
        %vm1769 = vmor %vm1767, %vm1768
        %v1770 = vsel %vm1769, %v1761, %v1766
        %v1771 = vrsqrt.pop %v1701
        %v1772 = vmul.f32 %v1771, %v1701
        %v1773 = vmul.f32 %v1772, %v1771
        %v1774 = vmul.f32 0.5, %v1773
        %v1775 = vsub.f32 1.5, %v1774
        %v1776 = vmul.f32 %v1771, %v1775
        %vm1777 = vweird.f32 %v1701
        %vm1778 = vweird.f32 %v1771
        %vm1779 = vmor %vm1777, %vm1778
        %v1780 = vsel %vm1779, %v1771, %v1776
        %v1781 = vrsqrt.pop %v1702
        %v1782 = vmul.f32 %v1781, %v1702
        %v1783 = vmul.f32 %v1782, %v1781
        %v1784 = vmul.f32 0.5, %v1783
        %v1785 = vsub.f32 1.5, %v1784
        %v1786 = vmul.f32 %v1781, %v1785
        %vm1787 = vweird.f32 %v1702
        %vm1788 = vweird.f32 %v1781
        %vm1789 = vmor %vm1787, %vm1788
        %v1790 = vsel %vm1789, %v1781, %v1786
        %v1791 = vrsqrt.pop %v1703
        %v1792 = vmul.f32 %v1791, %v1703
        %v1793 = vmul.f32 %v1792, %v1791
        %v1794 = vmul.f32 0.5, %v1793
        %v1795 = vsub.f32 1.5, %v1794
        %v1796 = vmul.f32 %v1791, %v1795
        %vm1797 = vweird.f32 %v1703
        %vm1798 = vweird.f32 %v1791
        %vm1799 = vmor %vm1797, %vm1798
        %v1800 = vsel %vm1799, %v1791, %v1796
        %v1801 = vrsqrt.pop %v1704
        %v1802 = vmul.f32 %v1801, %v1704
        %v1803 = vmul.f32 %v1802, %v1801
        %v1804 = vmul.f32 0.5, %v1803
        %v1805 = vsub.f32 1.5, %v1804
        %v1806 = vmul.f32 %v1801, %v1805
        %vm1807 = vweird.f32 %v1704
        %vm1808 = vweird.f32 %v1801
        %vm1809 = vmor %vm1807, %vm1808
        %v1810 = vsel %vm1809, %v1801, %v1806
        %v1811 = vrsqrt.pop %v1705
        %v1812 = vmul.f32 %v1811, %v1705
        %v1813 = vmul.f32 %v1812, %v1811
        %v1814 = vmul.f32 0.5, %v1813
        %v1815 = vsub.f32 1.5, %v1814
        %v1816 = vmul.f32 %v1811, %v1815
        %vm1817 = vweird.f32 %v1705
        %vm1818 = vweird.f32 %v1811
        %vm1819 = vmor %vm1817, %vm1818
        %v1820 = vsel %vm1819, %v1811, %v1816
        %v1821 = vrsqrt.pop %v1706
        %v1822 = vmul.f32 %v1821, %v1706
        %v1823 = vmul.f32 %v1822, %v1821
        %v1824 = vmul.f32 0.5, %v1823
        %v1825 = vsub.f32 1.5, %v1824
        %v1826 = vmul.f32 %v1821, %v1825
        %vm1827 = vweird.f32 %v1706
        %vm1828 = vweird.f32 %v1821
        %vm1829 = vmor %vm1827, %vm1828
        %v1830 = vsel %vm1829, %v1821, %v1826
        %v1831 = vrsqrt.pop %v1707
        %v1832 = vmul.f32 %v1831, %v1707
        %v1833 = vmul.f32 %v1832, %v1831
        %v1834 = vmul.f32 0.5, %v1833
        %v1835 = vsub.f32 1.5, %v1834
        %v1836 = vmul.f32 %v1831, %v1835
        %vm1837 = vweird.f32 %v1707
        %vm1838 = vweird.f32 %v1831
        %vm1839 = vmor %vm1837, %vm1838
        %v1840 = vsel %vm1839, %v1831, %v1836
        %v1841 = vrsqrt.pop %v1708
        %v1842 = vmul.f32 %v1841, %v1708
        %v1843 = vmul.f32 %v1842, %v1841
        %v1844 = vmul.f32 0.5, %v1843
        %v1845 = vsub.f32 1.5, %v1844
        %v1846 = vmul.f32 %v1841, %v1845
        %vm1847 = vweird.f32 %v1708
        %vm1848 = vweird.f32 %v1841
        %vm1849 = vmor %vm1847, %vm1848
        %v1850 = vsel %vm1849, %v1841, %v1846
        %v1851 = vrsqrt.pop %v1709
        %v1852 = vmul.f32 %v1851, %v1709
        %v1853 = vmul.f32 %v1852, %v1851
        %v1854 = vmul.f32 0.5, %v1853
        %v1855 = vsub.f32 1.5, %v1854
        %v1856 = vmul.f32 %v1851, %v1855
        %vm1857 = vweird.f32 %v1709
        %vm1858 = vweird.f32 %v1851
        %vm1859 = vmor %vm1857, %vm1858
        %v1860 = vsel %vm1859, %v1851, %v1856
        %v1861 = vrsqrt.pop %v1710
        %v1862 = vmul.f32 %v1861, %v1710
        %v1863 = vmul.f32 %v1862, %v1861
        %v1864 = vmul.f32 0.5, %v1863
        %v1865 = vsub.f32 1.5, %v1864
        %v1866 = vmul.f32 %v1861, %v1865
        %vm1867 = vweird.f32 %v1710
        %vm1868 = vweird.f32 %v1861
        %vm1869 = vmor %vm1867, %vm1868
        %v1870 = vsel %vm1869, %v1861, %v1866
        %v1871 = vmul.f32 %v1398, %v1720
        %v1872 = vmul.f32 %v1401, %v1730
        %v1873 = vmul.f32 %v1404, %v1740
        %v1874 = vmul.f32 %v1407, %v1750
        %v1875 = vmul.f32 %v1410, %v1760
        %v1876 = vmul.f32 %v1413, %v1770
        %v1877 = vmul.f32 %v1416, %v1780
        %v1878 = vmul.f32 %v1419, %v1790
        %v1879 = vmul.f32 %v1422, %v1800
        %v1880 = vmul.f32 %v1425, %v1810
        %v1881 = vmul.f32 %v1428, %v1820
        %v1882 = vmul.f32 %v1431, %v1830
        %v1883 = vmul.f32 %v1434, %v1840
        %v1884 = vmul.f32 %v1437, %v1850
        %v1885 = vmul.f32 %v1440, %v1860
        %v1886 = vmul.f32 %v1443, %v1870
        %v1887 = vld [vmem:[%s7] sm:$0x1]
        %v1889 = vperm.slane %v1887, 0
        %v1891 = vadd.f32 %v1871, %v1889
        %v1892 = vadd.f32 %v1872, %v1889
        %v1893 = vadd.f32 %v1873, %v1889
        %v1894 = vadd.f32 %v1874, %v1889
        %v1895 = vadd.f32 %v1875, %v1889
        %v1896 = vadd.f32 %v1876, %v1889
        %v1897 = vadd.f32 %v1877, %v1889
        %v1898 = vadd.f32 %v1878, %v1889
        %v1899 = vadd.f32 %v1879, %v1889
        %v1900 = vadd.f32 %v1880, %v1889
        %v1901 = vadd.f32 %v1881, %v1889
        %v1902 = vadd.f32 %v1882, %v1889
        %v1903 = vadd.f32 %v1883, %v1889
        %v1904 = vadd.f32 %v1884, %v1889
        %v1905 = vadd.f32 %v1885, %v1889
        %v1906 = vadd.f32 %v1886, %v1889
        %vm1907 = vcmask 392192
        %1908 = vst.msk [vmem:[%s312] sm:$0xff] %vm1907, %v1891
        %1909 = vst.msk [vmem:[%s312 + $0x8] sm:$0xff] %vm1907, %v1892
        %1910 = vst.msk [vmem:[%s312 + $0x10] sm:$0xff] %vm1907, %v1893
        %1911 = vst.msk [vmem:[%s312 + $0x18] sm:$0xff] %vm1907, %v1894
        %1912 = vst.msk [vmem:[%s312 + $0x20] sm:$0xff] %vm1907, %v1895
        %1913 = vst.msk [vmem:[%s312 + $0x28] sm:$0xff] %vm1907, %v1896
        %1914 = vst.msk [vmem:[%s312 + $0x30] sm:$0xff] %vm1907, %v1897
        %1915 = vst.msk [vmem:[%s312 + $0x38] sm:$0xff] %vm1907, %v1898
        %1916 = vst.msk [vmem:[%s312 + $0x40] sm:$0xff] %vm1907, %v1899
        %1917 = vst.msk [vmem:[%s312 + $0x48] sm:$0xff] %vm1907, %v1900
        %1918 = vst.msk [vmem:[%s312 + $0x50] sm:$0xff] %vm1907, %v1901
        %1919 = vst.msk [vmem:[%s312 + $0x58] sm:$0xff] %vm1907, %v1902
        %1920 = vst.msk [vmem:[%s312 + $0x60] sm:$0xff] %vm1907, %v1903
        %1921 = vst.msk [vmem:[%s312 + $0x68] sm:$0xff] %vm1907, %v1904
        %1922 = vst.msk [vmem:[%s312 + $0x70] sm:$0xff] %vm1907, %v1905
        %1923 = vst.msk [vmem:[%s312 + $0x78] sm:$0xff] %vm1907, %v1906
        %s1924 = sand.u32 %s217, 1
        %s1925 = scalar_lea.sflag [#allocation4], %s1924
        %s1926 = sand.u32 %s217, 1
        %s1927 = smul.addr %s1926, 128
        %s1928 = scalar_lea.vmem [#allocation3], %s1927
        // Predicated region
        $region69: #{tpu_custom_call.1} parent=51 // pred_check
          %p1929 = pneg %p227
        $region70: #{tpu_custom_call.1} parent=51 // pred_check_branch
          %1931 = sbr.rel (%p1929) target = $region72
        $region71: #{tpu_custom_call.1} parent=51 // pred_region
          %s1932 = smul.u32 8, %s27
          %1934 = vsyncadd %s1925, 0
          %s1935 = smul.addr %s1932, 2
          %s1936 = smul.addr %s26, 32
          %s1937 = sadd.s32 %s1935, %s1936
          %s1938 = smul.addr %s1937, 8
          %s1939 = scalar_lea.hbm %s8, %s1938
          %s1940 = sshll.u32 %s1928, 4
          %s1941 = int_to_ptr.vmem [resolvable:$true] %s1940
          %s1942 = sshll.u32 %s1939, 4
          %s1943 = int_to_ptr.hbm [resolvable:$true] %s1942
          %1948 = dma.vmem_to_hbm [thread:$0]  %s1941, 2048, %s1943, %s1925, 128, 128, 8
        $region72: #{tpu_custom_call.1} parent=51 // pred_fallthru
          _
      $region52: #{tpu_custom_call.1} parent=5 // pred_fallthru
        _
      %p1949 = scmp.le.s32.totalorder 2, %s17
      // Predicated region
      $region73: #{tpu_custom_call.1} parent=5 // pred_check
        %p1950 = pneg %p1949
      $region74: #{tpu_custom_call.1} parent=5 // pred_check_branch
        %1952 = sbr.rel (%p1950) target = $region76
      $region75: #{tpu_custom_call.1} parent=5 // pred_region
        %s1953 = ssub.s32 %s17, 2
        // Predicated region
        $region77: #{tpu_custom_call.1} parent=75 // pred_check
          %p1954 = pneg %p233
        $region78: #{tpu_custom_call.1} parent=75 // pred_check_branch
          %1956 = sbr.rel (%p1954) target = $region80
        $region79: #{tpu_custom_call.1} parent=75 // pred_region
          %s1957 = sand.u32 %s218, 1
          %s1958 = scalar_lea.sflag [#allocation4], %s1957
          %s1959 = sand.u32 %s218, 1
          %s1960 = smul.addr %s1959, 128
          %s1961 = scalar_lea.vmem [#allocation3], %s1960
          %1963 = dma.done %s1958, 2048
        $region80: #{tpu_custom_call.1} parent=75 // pred_fallthru
          _
      $region76: #{tpu_custom_call.1} parent=5 // pred_fallthru
        _
    $region6: #{tpu_custom_call.1} parent=1 // loop_footer
      %s21 = sadd.s32 1, %s17
    $region7: #{tpu_custom_call.1} parent=1 // loop_footer_branch
      %16 = sbr.rel target = $region3
    $region8: #{tpu_custom_call.1} parent=1 // loop_exit
      _
    %1964 = vsyncpa [#allocation4], 1
    %s1965 = scalar_lea.sflag [#allocation4], 1
    %1966 = vsyncpa %s1965, 1

</llo_original>
